<compile_context>
chip_gen: v7x
topology: tpu7x:2x2x1
jax: 0.10.0
libtpu: 0.0.40
codegen_flags: <defaults>
</compile_context>

<pallas_src>
import jax
import jax.numpy as jnp
from jax.experimental import pallas as pl
from jax.experimental.pallas import tpu as pltpu


def _decode_kernel(pred_ref, gxy_ref, rowp_ref, eye_ref, out_ref):
    """One (batch, anchor, hw-tile) grid step.

    pred_ref : (1, 1, attrs, L)  channel-major net-output block (lane-dense)
    gxy_ref  : (2, L)            rows = [gx*stride_w ; gy*stride_h]
    rowp_ref : (1, attrs, 4)     per-attribute [sign, mul, is_x, is_y]
    eye_ref  : (attrs, attrs)    f32 identity (MXU transpose operand)
    out_ref  : (1, 1, L, attrs)  decoded block, attrs-last
    """
    p = pred_ref[0, 0].astype(jnp.float32)          # (attrs, L)
    rowp = rowp_ref[0]                              # (attrs, 4)
    sign = rowp[:, 0:1]                             # +1 on w/h rows, -1 elsewhere
    mul = rowp[:, 1:2]
    is_x = rowp[:, 2:3] > 0.5
    is_y = rowp[:, 3:4] > 0.5

    # One exp per element (perf item 2):
    #   w/h rows      : exp(p)           (sign = +1)
    #   all other rows: sigmoid(p) = 1/(1 + exp(-p))   (sign = -1)
    # Clamp keeps 1+t finite so the Newton step is NaN-safe for extreme logits
    # (deviation only for |logit| > 60, far outside any sane YOLO output).
    z = jnp.minimum(p * sign, 60.0)
    t = jnp.exp(z)                                  # EUP
    d = 1.0 + t
    r = pl.reciprocal(d, approx=True)               # EUP vrcp (near-free slot)
    r = r * (2.0 - d * r)                           # one Newton step -> ~f32 accuracy
    val = jnp.where(sign > 0.0, t, r)

    # Additive cell grid: gx*stride_w on row 0, gy*stride_h on row 1, 0 elsewhere.
    gxs = gxy_ref[0:1, :]                           # (1, L)
    gys = gxy_ref[1:2, :]                           # (1, L)
    add = jnp.where(is_x, gxs, jnp.where(is_y, gys, 0.0))

    cm = val * mul + add                            # (attrs, L) channel-major result

    # attrs-last layout produced in-kernel (perf item 1):
    #   out[l, c] = sum_a cm[a, l] * I[a, c]  ==  cm.T
    # Done as an identity matmul on the idle MXU (exact at HIGHEST precision),
    # which avoids any Mosaic relayout/reshape and the post-kernel XLA permute.
    out_ref[0, 0] = jax.lax.dot_general(
        cm, eye_ref[...], (((0,), (0,)), ((), ())),
        preferred_element_type=jnp.float32,
        precision=jax.lax.Precision.HIGHEST,
    ).astype(out_ref.dtype)


def _round_up(x, m):
    return (x + m - 1) // m * m


def _pick_hw_tile(hw, attrs, other_steps, cap=4096, vmem_budget=8 << 20):
    """Choose the hw tile length.

    * Capped by an explicit double-buffered VMEM budget (input block rows are
      sublane-padded, output block lanes are padded to 128) — keeps the kernel
      well under v5e's 16 MiB default scoped VMEM without compiler-param bumps.
    * Full-extent (exact) tile when it fits; otherwise a ~balanced multiple of
      128 (Pallas masks the ragged tail — no wrapper pad/slice passes).
    * If the rest of the grid has < 2 steps, hw is split so both v7x
      TensorCores get work.
    """
    bytes_per_col = 4 * 2 * (_round_up(attrs, 8) + _round_up(attrs, 128))
    cap = min(cap, max(512, (vmem_budget // bytes_per_col) // 128 * 128))
    if hw <= cap and other_steps >= 2:
        return hw
    n = max(2 if other_steps < 2 else 1, pl.cdiv(hw, cap))
    return min(_round_up(pl.cdiv(hw, n), 128), hw)


def decode_box(x, anchors, num_classes, img_size):
    """Pallas implementation of DecodeBox.forward.

    x:       (B, A*(5+num_classes), H, W)  float32 or bfloat16 (NCHW)
    anchors: (A, 2) float
    returns: (B, A*H*W, 5+num_classes) float32
    """
    B, C, H, W = x.shape
    A = anchors.shape[0]
    attrs = 5 + num_classes
    assert C == A * attrs

    # Transcribe the torch module exactly: it labels size(2) as "width" and
    # size(3) as "height" (and views the map accordingly), so gx = l % H.
    in_w, in_h = H, W
    hw = H * W
    stride_w = img_size[0] / in_w
    stride_h = img_size[1] / in_h

    # Channel-major slab; free reshape, no dtype cast here (kernel upcasts).
    pred = x.reshape(B, A, attrs, hw)

    # Hoisted cell grid, pre-scaled by the stride (perf item 8).
    lane = jnp.arange(hw, dtype=jnp.int32)
    gxy = jnp.stack(
        [(lane % in_w).astype(jnp.float32) * jnp.float32(stride_w),
         (lane // in_w).astype(jnp.float32) * jnp.float32(stride_h)], axis=0)

    # Per-(anchor, attribute) coefficients [sign, mul, is_x, is_y]:
    #   row 0: (sigmoid + gx) * stride_w
    #   row 1: (sigmoid + gy) * stride_h
    #   row 2: exp * anchor_w          (== (aw/stride_w) * stride_w)
    #   row 3: exp * anchor_h
    #   rows 4+: sigmoid
    c = jnp.arange(attrs, dtype=jnp.int32)
    sign = jnp.where((c == 2) | (c == 3), 1.0, -1.0).astype(jnp.float32)
    anc = jnp.asarray(anchors, jnp.float32)
    base_mul = jnp.where(c == 0, stride_w,
               jnp.where(c == 1, stride_h, 1.0)).astype(jnp.float32)
    mul = jnp.broadcast_to(base_mul, (A, attrs))
    mul = mul.at[:, 2].set(anc[:, 0]).at[:, 3].set(anc[:, 1])
    rowp = jnp.stack([
        jnp.broadcast_to(sign, (A, attrs)),
        mul,
        jnp.broadcast_to((c == 0).astype(jnp.float32), (A, attrs)),
        jnp.broadcast_to((c == 1).astype(jnp.float32), (A, attrs)),
    ], axis=-1)                                               # (A, attrs, 4)

    eye = jnp.eye(attrs, dtype=jnp.float32)

    hw_tile = _pick_hw_tile(hw, attrs, other_steps=B * A)
    n_t = pl.cdiv(hw, hw_tile)

    out = pl.pallas_call(
        _decode_kernel,
        out_shape=jax.ShapeDtypeStruct((B, A, hw, attrs), jnp.float32),
        grid=(B, A, n_t),
        in_specs=[
            pl.BlockSpec((1, 1, attrs, hw_tile), lambda b, a, t: (b, a, 0, t)),
            pl.BlockSpec((2, hw_tile), lambda b, a, t: (0, t)),
            # tiny coefficient tables: constant / per-anchor block index keeps
            # them VMEM-resident across the hw-tile loop.
            pl.BlockSpec((1, attrs, 4), lambda b, a, t: (a, 0, 0)),
            pl.BlockSpec((attrs, attrs), lambda b, a, t: (0, 0)),
        ],
        # Each out block covers the full attrs (minor) extent, so its HBM
        # destination is one contiguous hw_tile*attrs*4-byte range per step.
        out_specs=pl.BlockSpec((1, 1, hw_tile, attrs), lambda b, a, t: (b, a, t, 0)),
        compiler_params=pltpu.CompilerParams(
            dimension_semantics=("parallel", "parallel", "parallel")),
    )(pred, gxy, rowp, eye)

    # Free (contiguous) reshape — no post-kernel transpose pass.
    return out.reshape(B, A * hw, attrs)


def decode_box_ref(x, anchors, num_classes, img_size):
    """Pure-JAX transcription of the PyTorch forward (for verification)."""
    B, C, H, W = x.shape
    A = anchors.shape[0]
    attrs = 5 + num_classes
    in_w, in_h = H, W
    stride_w = img_size[0] / in_w
    stride_h = img_size[1] / in_h

    pred = x.astype(jnp.float32).reshape(B, A, attrs, in_h, in_w)
    pred = jnp.transpose(pred, (0, 1, 3, 4, 2))          # (B, A, in_h, in_w, attrs)

    sx = jax.nn.sigmoid(pred[..., 0])
    sy = jax.nn.sigmoid(pred[..., 1])
    w = pred[..., 2]
    h = pred[..., 3]
    conf = jax.nn.sigmoid(pred[..., 4])
    cls = jax.nn.sigmoid(pred[..., 5:])

    scaled = jnp.asarray(anchors, jnp.float32) / jnp.array(
        [stride_w, stride_h], jnp.float32)
    gx = jnp.broadcast_to(jnp.arange(in_w, dtype=jnp.float32), (B, A, in_h, in_w))
    gy = jnp.broadcast_to(jnp.arange(in_h, dtype=jnp.float32)[:, None],
                          (B, A, in_h, in_w))
    aw = scaled[:, 0].reshape(1, A, 1, 1)
    ah = scaled[:, 1].reshape(1, A, 1, 1)

    boxes = jnp.stack([sx + gx, sy + gy, jnp.exp(w) * aw, jnp.exp(h) * ah], axis=-1)
    scale = jnp.array([stride_w, stride_h, stride_w, stride_h], jnp.float32)
    return jnp.concatenate(
        [boxes.reshape(B, -1, 4) * scale,
         conf.reshape(B, -1, 1),
         cls.reshape(B, -1, num_classes)], axis=-1)


if __name__ == "__main__":
    # 3 anchors, 3 classes -> bbox_attrs = 8 -> C = 24; 16x16 map; img 64x64.
    num_classes = 3
    anchors = jnp.array([[10.0, 13.0], [16.0, 30.0], [33.0, 23.0]], dtype=jnp.float32)
    img_size = (64, 64)

    key = jax.random.PRNGKey(0)
    k0, k1 = jax.random.split(key)

    x = jax.random.normal(k0, (2, 24, 16, 16), dtype=jnp.float32)
    out = jax.block_until_ready(decode_box(x, anchors, num_classes, img_size))
    ref = decode_box_ref(x, anchors, num_classes, img_size)
    assert out.shape == ref.shape == (2, 3 * 16 * 16, 5 + num_classes)
    assert jnp.allclose(out, ref, rtol=1e-4, atol=1e-4), "mismatch vs reference"

    # Rectangular map: exercises the module's width=size(2)/height=size(3)
    # convention (both kernel and reference transcribe the torch code exactly).
    x2 = jax.random.normal(k1, (2, 24, 8, 16), dtype=jnp.float32)
    out2 = jax.block_until_ready(decode_box(x2, anchors, num_classes, img_size))
    ref2 = decode_box_ref(x2, anchors, num_classes, img_size)
    assert out2.shape == ref2.shape == (2, 3 * 8 * 16, 5 + num_classes)
    assert jnp.allclose(out2, ref2, rtol=1e-4, atol=1e-4), "rect mismatch vs reference"

    print("KERNEL_OK")
</pallas_src>

<mosaic_0001>
module attributes {stable_mosaic.version = 11 : i64} {
  func.func @_decode_kernel(%arg0: i32, %arg1: i32, %arg2: i32, %arg3: memref<1x1x8x256xf32, #tpu.memory_space<vmem>>, %arg4: memref<2x256xf32, #tpu.memory_space<vmem>>, %arg5: memref<1x8x4xf32, #tpu.memory_space<vmem>>, %arg6: memref<8x8xf32, #tpu.memory_space<vmem>>, %arg7: memref<1x1x256x8xf32, #tpu.memory_space<vmem>>) attributes {dimension_semantics = [#tpu.dimension_semantics<parallel>, #tpu.dimension_semantics<parallel>, #tpu.dimension_semantics<parallel>], iteration_bounds = array<i64: 2, 3, 1>, scalar_prefetch = 0 : i64, scratch_operands = 0 : i64, tpu.core_type = #tpu.core_type<tc>, window_params = [{transform_indices = @transform_0, window_bounds = array<i64: 1, 1, 8, 256>}, {transform_indices = @transform_1, window_bounds = array<i64: 2, 256>}, {transform_indices = @transform_2, window_bounds = array<i64: 1, 8, 4>}, {pipeline_mode = #tpu.pipeline_mode<synchronous>, transform_indices = @transform_3, window_bounds = array<i64: 8, 8>}, {transform_indices = @transform_4, window_bounds = array<i64: 1, 1, 256, 8>}]} {
    %c0 = arith.constant 0 : index
    %c0_0 = arith.constant 0 : index
    %c0_1 = arith.constant 0 : index
    %c0_2 = arith.constant 0 : index
    %0 = vector.load %arg3[%c0, %c0_0, %c0_1, %c0_2] : memref<1x1x8x256xf32, #tpu.memory_space<vmem>>, vector<1x1x8x256xf32>
    %1 = vector.shape_cast %0 : vector<1x1x8x256xf32> to vector<8x256xf32>
    %c0_3 = arith.constant 0 : index
    %c0_4 = arith.constant 0 : index
    %c0_5 = arith.constant 0 : index
    %2 = vector.load %arg5[%c0_3, %c0_4, %c0_5] : memref<1x8x4xf32, #tpu.memory_space<vmem>>, vector<1x8x4xf32>
    %3 = vector.shape_cast %2 : vector<1x8x4xf32> to vector<8x4xf32>
    %4 = vector.extract_strided_slice %3 {offsets = [0, 0], sizes = [8, 1], strides = [1, 1]} : vector<8x4xf32> to vector<8x1xf32>
    %5 = vector.extract_strided_slice %3 {offsets = [0, 1], sizes = [8, 1], strides = [1, 1]} : vector<8x4xf32> to vector<8x1xf32>
    %6 = vector.extract_strided_slice %3 {offsets = [0, 2], sizes = [8, 1], strides = [1, 1]} : vector<8x4xf32> to vector<8x1xf32>
    %cst = arith.constant 5.000000e-01 : f32
    %7 = vector.broadcast %cst : f32 to vector<8x1xf32>
    %8 = arith.cmpf ogt, %6, %7 : vector<8x1xf32>
    %9 = vector.extract_strided_slice %3 {offsets = [0, 3], sizes = [8, 1], strides = [1, 1]} : vector<8x4xf32> to vector<8x1xf32>
    %cst_6 = arith.constant 5.000000e-01 : f32
    %10 = vector.broadcast %cst_6 : f32 to vector<8x1xf32>
    %11 = arith.cmpf ogt, %9, %10 : vector<8x1xf32>
    %12 = vector.broadcast %4 : vector<8x1xf32> to vector<8x256xf32>
    %13 = arith.mulf %1, %12 : vector<8x256xf32>
    %cst_7 = arith.constant 6.000000e+01 : f32
    %14 = vector.broadcast %cst_7 : f32 to vector<8x256xf32>
    %15 = arith.minimumf %13, %14 : vector<8x256xf32>
    %16 = math.exp %15 : vector<8x256xf32>
    %cst_8 = arith.constant 1.000000e+00 : f32
    %17 = vector.broadcast %cst_8 : f32 to vector<8x256xf32>
    %18 = arith.addf %17, %16 : vector<8x256xf32>
    %19 = tpu.reciprocal %18 {approx = true} : vector<8x256xf32> -> vector<8x256xf32>
    %20 = arith.mulf %18, %19 : vector<8x256xf32>
    %cst_9 = arith.constant 2.000000e+00 : f32
    %21 = vector.broadcast %cst_9 : f32 to vector<8x256xf32>
    %22 = arith.subf %21, %20 : vector<8x256xf32>
    %23 = arith.mulf %19, %22 : vector<8x256xf32>
    %cst_10 = arith.constant 0.000000e+00 : f32
    %24 = vector.broadcast %cst_10 : f32 to vector<8x1xf32>
    %25 = arith.cmpf ogt, %4, %24 : vector<8x1xf32>
    %26 = vector.shape_cast %25 : vector<8x1xi1> to vector<8x1xi1>
    %27 = vector.broadcast %26 : vector<8x1xi1> to vector<8x256xi1>
    %28 = arith.select %27, %16, %23 : vector<8x256xi1>, vector<8x256xf32>
    %c0_11 = arith.constant 0 : index
    %c0_12 = arith.constant 0 : index
    %29 = vector.load %arg4[%c0_11, %c0_12] : memref<2x256xf32, #tpu.memory_space<vmem>>, vector<1x256xf32>
    %c1 = arith.constant 1 : index
    %c0_13 = arith.constant 0 : index
    %30 = vector.load %arg4[%c1, %c0_13] : memref<2x256xf32, #tpu.memory_space<vmem>>, vector<1x256xf32>
    %cst_14 = arith.constant 0.000000e+00 : f32
    %31 = vector.shape_cast %11 : vector<8x1xi1> to vector<8x1xi1>
    %32 = vector.broadcast %31 : vector<8x1xi1> to vector<8x256xi1>
    %33 = vector.shape_cast %30 : vector<1x256xf32> to vector<1x256xf32>
    %34 = vector.broadcast %33 : vector<1x256xf32> to vector<8x256xf32>
    %35 = vector.broadcast %cst_14 : f32 to vector<8x256xf32>
    %36 = arith.select %32, %34, %35 : vector<8x256xi1>, vector<8x256xf32>
    %37 = vector.shape_cast %8 : vector<8x1xi1> to vector<8x1xi1>
    %38 = vector.broadcast %37 : vector<8x1xi1> to vector<8x256xi1>
    %39 = vector.shape_cast %29 : vector<1x256xf32> to vector<1x256xf32>
    %40 = vector.broadcast %39 : vector<1x256xf32> to vector<8x256xf32>
    %41 = arith.select %38, %40, %36 : vector<8x256xi1>, vector<8x256xf32>
    %42 = vector.broadcast %5 : vector<8x1xf32> to vector<8x256xf32>
    %43 = arith.mulf %28, %42 : vector<8x256xf32>
    %44 = arith.addf %43, %41 : vector<8x256xf32>
    %c0_15 = arith.constant 0 : index
    %c0_16 = arith.constant 0 : index
    %45 = vector.load %arg6[%c0_15, %c0_16] : memref<8x8xf32, #tpu.memory_space<vmem>>, vector<8x8xf32>
    %cst_17 = arith.constant dense<0.000000e+00> : vector<256x8xf32>
    %46 = tpu.matmul %44, %45, %cst_17 {dimension_numbers = #tpu.dot_dimension_numbers<[0], [0], [1], [1], [0, 1, 1, 1], [], []>, precision = #tpu.contract_precision<fp32>} : vector<8x256xf32>, vector<8x8xf32>, vector<256x8xf32> -> vector<256x8xf32>
    %c0_18 = arith.constant 0 : index
    %c0_19 = arith.constant 0 : index
    %c0_20 = arith.constant 0 : index
    %c0_21 = arith.constant 0 : index
    %47 = vector.load %arg7[%c0_18, %c0_19, %c0_20, %c0_21] : memref<1x1x256x8xf32, #tpu.memory_space<vmem>>, vector<1x1x256x8xf32>
    %48 = vector.shape_cast %47 : vector<1x1x256x8xf32> to vector<256x8xf32>
    %49 = vector.shape_cast %46 : vector<256x8xf32> to vector<1x1x256x8xf32>
    tpu.vector_store %arg7[%c0_18, %c0_19, %c0_20, %c0_21], %49 {strides = array<i32>} : memref<1x1x256x8xf32, #tpu.memory_space<vmem>>, vector<1x1x256x8xf32>,
    return
  }
  func.func @transform_0(%arg0: i32, %arg1: i32, %arg2: i32) -> (i32, i32, i32, i32) {
    %c0_i32 = arith.constant 0 : i32
    %c0_i32_0 = arith.constant 0 : i32
    return %arg0, %arg1, %c0_i32, %arg2 : i32, i32, i32, i32
  }
  func.func @transform_1(%arg0: i32, %arg1: i32, %arg2: i32) -> (i32, i32) {
    %c0_i32 = arith.constant 0 : i32
    %c0_i32_0 = arith.constant 0 : i32
    return %c0_i32, %arg2 : i32, i32
  }
  func.func @transform_2(%arg0: i32, %arg1: i32, %arg2: i32) -> (i32, i32, i32) {
    %c0_i32 = arith.constant 0 : i32
    %c0_i32_0 = arith.constant 0 : i32
    %c0_i32_1 = arith.constant 0 : i32
    return %arg1, %c0_i32, %c0_i32_0 : i32, i32, i32
  }
  func.func @transform_3(%arg0: i32, %arg1: i32, %arg2: i32) -> (i32, i32) {
    %c0_i32 = arith.constant 0 : i32
    %c0_i32_0 = arith.constant 0 : i32
    %c0_i32_1 = arith.constant 0 : i32
    return %c0_i32, %c0_i32_0 : i32, i32
  }
  func.func @transform_4(%arg0: i32, %arg1: i32, %arg2: i32) -> (i32, i32, i32, i32) {
    %c0_i32 = arith.constant 0 : i32
    %c0_i32_0 = arith.constant 0 : i32
    return %arg0, %arg1, %arg2, %c0_i32 : i32, i32, i32, i32
  }
}

</mosaic_0001>

<llo_original>
// kernel: tpu_custom_call.1
$region0: #{tpu_custom_call.1}
  #allocation0 [shape = 'u32[]', space=smem, size = 0x4, offset = 0x4, fixed_abs, tag = 'smem constant byte address 0x4 - core index']
  #allocation1 [shape = 'u32[144,128]{1,0:T(1,128)}', space=vmem, size = 0x12000, scoped, tag = 'internal scratch']
  %s0 = inlined_call_operand.hbm [shape: f32[2,3,8,256], index: 0, kind: input, shape index: {}]
  %s1 = inlined_call_operand.vmem [shape: f32[2,256], index: 1, kind: input, shape index: {}]
  %s2 = inlined_call_operand.vmem [shape: f32[3,8,4], index: 2, kind: input, shape index: {}]
  %s3 = inlined_call_operand.vmem [shape: f32[8,8], index: 3, kind: input, shape index: {}]
  %s4 = inlined_call_operand.vmem [shape: f32[2,3,256,8], index: 4, kind: output, shape index: {}]
  %s5 = sld [smem:[#allocation0]]
  $region53: #{tpu_custom_call.1} parent=0
    _
  %s7 = ssub.s32 1, %s5
  %s8 = scalar_select 0, %s7, %s5
  $region1: #{tpu_custom_call.1} parent=0
    #allocation2 [shape = 'u8[16384]{0}', space=vmem, size = 0x4000, scoped, tag = 'input window, operand 0']
    #allocation3 [shape = 's32[2]{0}', space=sflag, size = 0x8, scoped, tag = 'scoped memory for tpu_custom_call.1']
    %9 = vsyncpa [#allocation3], 0
    %s10 = scalar_lea.sflag [#allocation3], 1
    %11 = vsyncpa %s10, 0
    loop: start=0, step=1, limit=8
    $region2: #{tpu_custom_call.1} parent=1 // loop_pre_header
      _
    $region3: #{tpu_custom_call.1} parent=1 // loop_header
      %s13 = sphi 0, %s17
      %p14 = scmp.ge.s32.totalorder %s13, 8
      %s20 = sphi 0, %s39
      %s21 = sphi 0, %s35
      %s22 = sphi 0, %s31
      %s23 = sphi 0, %s20
      %s24 = sphi 0, %s21
      %s25 = sphi 0, %s22
      %s26 = sphi 0, %s23
      %s27 = sphi 0, %s24
      %s28 = sphi 0, %s25
      %s46 = sphi 0, %s48
      %s49 = sphi 0, %s46
      %s50 = sphi 0, %s49
      %s66 = sphi 0, %s50
      %s72 = sphi 0, %s74
      %s75 = sphi 0, %s72
      %s76 = sphi 0, %s75
      %s92 = sphi 0, %s76
      %s98 = sphi 0, %s100
      %s101 = sphi 0, %s98
      %s102 = sphi 0, %s101
      %s118 = sphi 0, %s102
      %s122 = sphi 0, %s122
      %s124 = sphi 0, %s122
      %s125 = sphi 0, %s124
      %s139 = sphi 0, %s125
      %s149 = sphi 0, %s151
      %s152 = sphi 0, %s149
      %s153 = sphi 0, %s152
      %s169 = sphi 0, %s153
    $region4: #{tpu_custom_call.1} parent=1 // loop_header_branch
      %16 = sbr.rel (%p14) target = $region8
    $region5: #{tpu_custom_call.1} parent=1 // loop_body
      %s18 = ssub.s32 %s13, 1
      %s19 = ssub.s32 %s13, 2
      %s29 = sadd.s32 1, %s22
      %p30 = scmp.ge.s32.totalorder %s29, 1
      %s31 = scalar_select %p30, 0, %s29
      %s32 = sadd.s32 1, %s21
      %s33 = scalar_select %p30, %s32, %s21
      %p34 = scmp.ge.s32.totalorder %s33, 3
      %s35 = scalar_select %p34, 0, %s33
      %s36 = sadd.s32 1, %s20
      %s37 = scalar_select %p34, %s36, %s20
      %p38 = scmp.ge.s32.totalorder %s37, 2
      %s39 = scalar_select %p38, 0, %s37
      %s40 = ssub.s32 %s20, %s39
      %s41 = ssub.s32 %s21, %s35
      %s42 = sor.u32 %s40, %s41
      %s43 = ssub.s32 %s22, %s31
      %s44 = sor.u32 %s42, %s43
      %p45 = scmp.eq.s32.totalorder %s44, 0
      %s47 = sadd.s32 %s46, 1
      %s48 = scalar_select %p45, %s46, %s47
      %p51 = pneg %p45
      %p52 = scmp.eq.s32.totalorder %s13, 5
      %p53 = por %p51, %p52
      %p54 = scmp.ne.s32.totalorder %s46, %s49
      %p55 = scmp.eq.s32.totalorder %s13, 0
      %p56 = por %p54, %p55
      %p57 = scmp.ne.s32.totalorder %s46, %s49
      %p58 = scmp.eq.s32.totalorder %s18, 5
      %p59 = por %p57, %p58
      %p60 = scmp.ne.s32.totalorder %s49, %s50
      %p61 = scmp.eq.s32.totalorder %s18, 0
      %p62 = por %p60, %p61
      %p63 = scmp.ne.s32.totalorder %s49, %s50
      %p64 = scmp.eq.s32.totalorder %s19, 5
      %p65 = por %p63, %p64
      %p67 = scmp.ne.s32.totalorder %s50, %s66
      %p68 = scmp.eq.s32.totalorder %s19, 0
      %p69 = por %p67, %p68
      %s70 = ssub.s32 %s22, %s31
      %p71 = scmp.eq.s32.totalorder %s70, 0
      %s73 = sadd.s32 %s72, 1
      %s74 = scalar_select %p71, %s72, %s73
      %p77 = pneg %p71
      %p78 = scmp.eq.s32.totalorder %s13, 5
      %p79 = por %p77, %p78
      %p80 = scmp.ne.s32.totalorder %s72, %s75
      %p81 = scmp.eq.s32.totalorder %s13, 0
      %p82 = por %p80, %p81
      %p83 = scmp.ne.s32.totalorder %s72, %s75
      %p84 = scmp.eq.s32.totalorder %s18, 5
      %p85 = por %p83, %p84
      %p86 = scmp.ne.s32.totalorder %s75, %s76
      %p87 = scmp.eq.s32.totalorder %s18, 0
      %p88 = por %p86, %p87
      %p89 = scmp.ne.s32.totalorder %s75, %s76
      %p90 = scmp.eq.s32.totalorder %s19, 5
      %p91 = por %p89, %p90
      %p93 = scmp.ne.s32.totalorder %s76, %s92
      %p94 = scmp.eq.s32.totalorder %s19, 0
      %p95 = por %p93, %p94
      %s96 = ssub.s32 %s21, %s35
      %p97 = scmp.eq.s32.totalorder %s96, 0
      %s99 = sadd.s32 %s98, 1
      %s100 = scalar_select %p97, %s98, %s99
      %p103 = pneg %p97
      %p104 = scmp.eq.s32.totalorder %s13, 5
      %p105 = por %p103, %p104
      %p106 = scmp.ne.s32.totalorder %s98, %s101
      %p107 = scmp.eq.s32.totalorder %s13, 0
      %p108 = por %p106, %p107
      %p109 = scmp.ne.s32.totalorder %s98, %s101
      %p110 = scmp.eq.s32.totalorder %s18, 5
      %p111 = por %p109, %p110
      %p112 = scmp.ne.s32.totalorder %s101, %s102
      %p113 = scmp.eq.s32.totalorder %s18, 0
      %p114 = por %p112, %p113
      %p115 = scmp.ne.s32.totalorder %s101, %s102
      %p116 = scmp.eq.s32.totalorder %s19, 5
      %p117 = por %p115, %p116
      %p119 = scmp.ne.s32.totalorder %s102, %s118
      %p120 = scmp.eq.s32.totalorder %s19, 0
      %p121 = por %p119, %p120
      %s123 = sadd.s32 %s122, 1
      %p126 = scmp.eq.s32.totalorder %s13, 5
      %p127 = scmp.ne.s32.totalorder %s122, %s124
      %p128 = scmp.eq.s32.totalorder %s13, 0
      %p129 = por %p127, %p128
      %p130 = scmp.ne.s32.totalorder %s122, %s124
      %p131 = scmp.eq.s32.totalorder %s18, 5
      %p132 = por %p130, %p131
      %p133 = scmp.ne.s32.totalorder %s124, %s125
      %p134 = scmp.eq.s32.totalorder %s18, 0
      %p135 = por %p133, %p134
      %p136 = scmp.ne.s32.totalorder %s124, %s125
      %p137 = scmp.eq.s32.totalorder %s19, 5
      %p138 = por %p136, %p137
      %p140 = scmp.ne.s32.totalorder %s125, %s139
      %p141 = scmp.eq.s32.totalorder %s19, 0
      %p142 = por %p140, %p141
      %s143 = ssub.s32 %s20, %s39
      %s144 = ssub.s32 %s21, %s35
      %s145 = sor.u32 %s143, %s144
      %s146 = ssub.s32 %s22, %s31
      %s147 = sor.u32 %s145, %s146
      %p148 = scmp.eq.s32.totalorder %s147, 0
      %s150 = sadd.s32 %s149, 1
      %s151 = scalar_select %p148, %s149, %s150
      %p154 = pneg %p148
      %p155 = scmp.eq.s32.totalorder %s13, 5
      %p156 = por %p154, %p155
      %p157 = scmp.ne.s32.totalorder %s149, %s152
      %p158 = scmp.eq.s32.totalorder %s13, 0
      %p159 = por %p157, %p158
      %p160 = scmp.ne.s32.totalorder %s149, %s152
      %p161 = scmp.eq.s32.totalorder %s18, 5
      %p162 = por %p160, %p161
      %p163 = scmp.ne.s32.totalorder %s152, %s153
      %p164 = scmp.eq.s32.totalorder %s18, 0
      %p165 = por %p163, %p164
      %p166 = scmp.ne.s32.totalorder %s152, %s153
      %p167 = scmp.eq.s32.totalorder %s19, 5
      %p168 = por %p166, %p167
      %p170 = scmp.ne.s32.totalorder %s153, %s169
      %p171 = scmp.eq.s32.totalorder %s19, 0
      %p172 = por %p170, %p171
      %p173 = scmp.le.s32.totalorder 1, %s13
      %p174 = scmp.lt.s32.totalorder %s13, 7
      %p175 = pnand %p173, %p174
      %p176 = pneg %p175
      // Predicated region
      $region9: #{tpu_custom_call.1} parent=5 // pred_check
        _
      $region10: #{tpu_custom_call.1} parent=5 // pred_check_branch
        %178 = sbr.rel (%p175) target = $region12
      $region11: #{tpu_custom_call.1} parent=5 // pred_region
        %s179 = ssub.s32 %s13, 1
        // Predicated region
        $region13: #{tpu_custom_call.1} parent=11 // pred_check
          %p180 = pneg %p88
        $region14: #{tpu_custom_call.1} parent=11 // pred_check_branch
          %182 = sbr.rel (%p180) target = $region16
        $region15: #{tpu_custom_call.1} parent=11 // pred_region
          %s183 = smul.u32 2, %s25
          %p184 = scmp.lt.s32.totalorder %s183, 1
          %s185 = scalar_select %p184, %s183, 1
          %s186 = smul.addr %s185, 2
          %s187 = scalar_lea.vmem %s1, %s186
          %s188 = smul.u32 2, %s25
        $region16: #{tpu_custom_call.1} parent=11 // pred_fallthru
          _
        // Predicated region
        $region17: #{tpu_custom_call.1} parent=11 // pred_check
          %p189 = pneg %p135
        $region18: #{tpu_custom_call.1} parent=11 // pred_check_branch
          %191 = sbr.rel (%p189) target = $region20
        $region19: #{tpu_custom_call.1} parent=11 // pred_region
          _
        $region20: #{tpu_custom_call.1} parent=11 // pred_fallthru
          _
      $region12: #{tpu_custom_call.1} parent=5 // pred_fallthru
        _
      %p192 = scmp.lt.s32.totalorder %s13, 6
      // Predicated region
      $region21: #{tpu_custom_call.1} parent=5 // pred_check
        %p193 = pneg %p192
      $region22: #{tpu_custom_call.1} parent=5 // pred_check_branch
        %195 = sbr.rel (%p193) target = $region24
      $region23: #{tpu_custom_call.1} parent=5 // pred_region
        // Predicated region
        $region25: #{tpu_custom_call.1} parent=23 // pred_check
          %p196 = pneg %p56
        $region26: #{tpu_custom_call.1} parent=23 // pred_check_branch
          %198 = sbr.rel (%p196) target = $region28
        $region27: #{tpu_custom_call.1} parent=23 // pred_region
          %s199 = sand.u32 %s46, 1
          %s200 = scalar_lea.sflag [#allocation3], %s199
          %s201 = sand.u32 %s46, 1
          %s202 = smul.addr %s201, 16
          %s203 = scalar_lea.vmem [#allocation2], %s202
          %s204 = smul.u32 2, %s22
          %s206 = ssub.s32 256, 256
          %207 = vsyncadd %s200, %s206
          %s208 = smul.addr %s21, 2
          %s209 = sadd.s32 %s204, %s208
          %s210 = smul.addr %s20, 6
          %s211 = sadd.s32 %s209, %s210
          %s212 = smul.addr %s211, 128
          %s213 = scalar_lea.hbm %s0, %s212
          %s215 = sshll.u32 %s203, 4
          %s216 = int_to_ptr.vmem [resolvable:$true] %s215
          %218 = dma.hbm_to_vmem [thread:$0]  %s213, 256, %s216, %s200
        $region28: #{tpu_custom_call.1} parent=23 // pred_fallthru
          _
        // Predicated region
        $region29: #{tpu_custom_call.1} parent=23 // pred_check
          %p219 = pneg %p108
        $region30: #{tpu_custom_call.1} parent=23 // pred_check_branch
          %221 = sbr.rel (%p219) target = $region32
        $region31: #{tpu_custom_call.1} parent=23 // pred_region
          %p222 = scmp.lt.s32.totalorder %s21, 2
          %s223 = scalar_select %p222, %s21, 2
          %s224 = smul.addr %s223, 8
          %s225 = scalar_lea.vmem %s2, %s224
        $region32: #{tpu_custom_call.1} parent=23 // pred_fallthru
          _
      $region24: #{tpu_custom_call.1} parent=5 // pred_fallthru
        _
      %p226 = scmp.le.s32.totalorder 1, %s13
      %p227 = scmp.lt.s32.totalorder %s13, 7
      %p228 = pnand %p226, %p227
      %p229 = pneg %p228
      // Predicated region
      $region33: #{tpu_custom_call.1} parent=5 // pred_check
        _
      $region34: #{tpu_custom_call.1} parent=5 // pred_check_branch
        %231 = sbr.rel (%p228) target = $region36
      $region35: #{tpu_custom_call.1} parent=5 // pred_region
        %s232 = ssub.s32 %s13, 1
        %s233 = sand.u32 %s49, 1
        %s234 = scalar_lea.sflag [#allocation3], %s233
        %s235 = sand.u32 %s49, 1
        %s236 = smul.addr %s235, 16
        %s237 = scalar_lea.vmem [#allocation2], %s236
        // Predicated region
        $region37: #{tpu_custom_call.1} parent=35 // pred_check
          %p238 = pneg %p62
        $region38: #{tpu_custom_call.1} parent=35 // pred_check_branch
          %240 = sbr.rel (%p238) target = $region40
        $region39: #{tpu_custom_call.1} parent=35 // pred_region
          %241 = dma.done %s234, 256
        $region40: #{tpu_custom_call.1} parent=35 // pred_fallthru
          _
        %s242 = sand.u32 %s49, 1
        %s243 = scalar_lea.sflag [#allocation3], %s242
        %s244 = sand.u32 %s49, 1
        %s245 = smul.addr %s244, 16
        %s246 = scalar_lea.vmem [#allocation2], %s245
        %p247 = pneg %p62
        %p248 = pneg %p59
        %s249 = smul.u32 2, %s25
        %p250 = scmp.lt.s32.totalorder %s249, 1
        %s251 = scalar_select %p250, %s249, 1
        %s252 = smul.addr %s251, 2
        %s253 = scalar_lea.vmem %s1, %s252
        %p254 = pneg %p88
        %p255 = pneg %p85
        %p256 = scmp.lt.s32.totalorder %s24, 2
        %s257 = scalar_select %p256, %s24, 2
        %s258 = smul.addr %s257, 8
        %s259 = scalar_lea.vmem %s2, %s258
        %p260 = pneg %p114
        %p261 = pneg %p111
        %p262 = pneg %p135
        %p263 = pneg %p132
        %p264 = pneg %p165
        %p265 = pneg %p162
        %s266 = smul.u32 32, %s25
        %p267 = scmp.lt.s32.totalorder %s23, 1
        %s268 = scalar_select %p267, %s23, 1
        %p269 = scmp.lt.s32.totalorder %s24, 2
        %s270 = scalar_select %p269, %s24, 2
        %p271 = scmp.lt.s32.totalorder %s266, 31
        %s272 = scalar_select %p271, %s266, 31
        %s273 = smul.addr %s270, 32
        %s274 = sadd.s32 %s272, %s273
        %s275 = smul.addr %s268, 96
        %s276 = sadd.s32 %s274, %s275
        %s277 = smul.addr %s276, 8
        %s278 = scalar_lea.vmem %s4, %s277
        %s279 = smul.u32 2, %s25
        %s280 = smul.u32 2, %s25
        %p281 = scmp.lt.s32.totalorder %s280, 1
        %s282 = scalar_select %p281, %s280, 1
        %s283 = smul.addr %s282, 2
        %s284 = scalar_lea.vmem %s1, %s283
        %s285 = smul.u32 2, %s25
        %p286 = scmp.lt.s32.totalorder %s24, 2
        %s287 = scalar_select %p286, %s24, 2
        %s288 = smul.addr %s287, 8
        %s289 = scalar_lea.vmem %s2, %s288
        %s290 = smul.u32 32, %s25
        %p291 = scmp.lt.s32.totalorder %s23, 1
        %s292 = scalar_select %p291, %s23, 1
        %p293 = scmp.lt.s32.totalorder %s24, 2
        %s294 = scalar_select %p293, %s24, 2
        %p295 = scmp.lt.s32.totalorder %s290, 31
        %s296 = scalar_select %p295, %s290, 31
        %s297 = smul.addr %s294, 32
        %s298 = sadd.s32 %s296, %s297
        %s299 = smul.addr %s292, 96
        %s300 = sadd.s32 %s298, %s299
        %s301 = smul.addr %s300, 8
        %s302 = scalar_lea.vmem %s4, %s301
        %s303 = smul.u32 32, %s25
        %v304 = vld [vmem:[%s237] sm:$0xff]
        %v305 = vld [vmem:[%s237 + $0x8] sm:$0xff]
        %v306 = vld [vmem:[%s289] sm:$0xff]
        %vm307 = vcmp.gt.f32.partialorder %v306, 0.5
        %309 = vset.pattern.permute.xlu0 0
        %310 = vperm.xlu0 %309, %v306
        %v311 = vpop.permute.xlu0 %310
        %v313 = vmul.f32 %v304, %v311
        %v314 = vmul.f32 %v305, %v311
        %v315 = vmin.f32 %v313, 60.0
        %v316 = vmin.f32 %v314, 60.0
        %v317 = vmul.f32 %v315, 1.442695
        %v318 = vpow.pop %v317
        %v319 = vmul.f32 %v316, 1.442695
        %v320 = vpow.pop %v319
        %v321 = vadd.f32 %v318, 1.0
        %v322 = vadd.f32 %v320, 1.0
        %v323 = vrcp.pop %v321
        %v324 = vrcp.pop %v322
        %v325 = vmul.f32 %v321, %v323
        %v326 = vmul.f32 %v322, %v324
        %v327 = vsub.f32 2.0, %v325
        %v328 = vsub.f32 2.0, %v326
        %v329 = vmul.f32 %v323, %v327
        %v330 = vmul.f32 %v324, %v328
        %vm331 = vcmp.gt.f32.partialorder %v306, 0.0
        %v332 = vsel %vm331, 1, 0
        %333 = vset.pattern.permute.xlu0 0
        %334 = vperm.xlu0 %333, %v332
        %v335 = vpop.permute.xlu0 %334
        %vm336 = vcmp.eq.s32.totalorder %v335, 1
        %v337 = vsel %vm336, %v318, %v329
        %v338 = vsel %vm336, %v320, %v330
        %v339 = vld [vmem:[%s284] ss:$2 sm:$0x3]
        %s340 = scalar_lea.vmem %s284, 1
        %v341 = vld [vmem:[%s340] ss:$2 sm:$0x3]
        %v342 = vsel %vm307, 1, 0
        %343 = vset.pattern.permute.xlu0 3
        %344 = vperm.xlu0 %343, %v342
        %v345 = vpop.permute.xlu0 %344
        %vm346 = vcmp.eq.s32.totalorder %v345, 1
        %v348 = vlaneseq
        %v349 = vshrl.u32 %v348, 7
        %v350 = vsub.s32 0, %v349
        %v351 = vrot.slane %v341, %v350
        %v352 = vlaneseq
        %v353 = vshrl.u32 %v352, 7
        %v354 = vsub.s32 1, %v353
        %v355 = vrot.slane %v341, %v354
        %v358 = vsel %vm346, %v351, 0.0
        %v359 = vsel %vm346, %v355, 0.0
        %360 = vset.pattern.permute.xlu0 2
        %361 = vperm.xlu0 %360, %v342
        %v362 = vpop.permute.xlu0 %361
        %vm363 = vcmp.eq.s32.totalorder %v362, 1
        %v365 = vlaneseq
        %v366 = vshrl.u32 %v365, 7
        %v367 = vsub.s32 0, %v366
        %v368 = vrot.slane %v339, %v367
        %v369 = vlaneseq
        %v370 = vshrl.u32 %v369, 7
        %v371 = vsub.s32 1, %v370
        %v372 = vrot.slane %v339, %v371
        %v375 = vsel %vm363, %v368, %v358
        %v376 = vsel %vm363, %v372, %v359
        %377 = vset.pattern.permute.xlu0 1
        %378 = vperm.xlu0 %377, %v306
        %v379 = vpop.permute.xlu0 %378
        %v381 = vmul.f32 %v337, %v379
        %v382 = vmul.f32 %v338, %v379
        %v383 = vadd.f32 %v381, %v375
        %v384 = vadd.f32 %v382, %v376
        %v385 = vld [vmem:[%s3] sm:$0xff]
        %386 = vxpose.xlu0.b32.start [1/16] %v383, 128
        %387 = vxpose.xlu0.b32.cont [2/16] 0.0, 128
        %388 = vxpose.xlu0.b32.cont [3/16] 0.0, 128
        %389 = vxpose.xlu0.b32.cont [4/16] 0.0, 128
        %390 = vxpose.xlu0.b32.cont [5/16] 0.0, 128
        %391 = vxpose.xlu0.b32.cont [6/16] 0.0, 128
        %392 = vxpose.xlu0.b32.cont [7/16] 0.0, 128
        %393 = vxpose.xlu0.b32.cont [8/16] 0.0, 128
        %394 = vxpose.xlu0.b32.cont [9/16] 0.0, 128
        %395 = vxpose.xlu0.b32.cont [10/16] 0.0, 128
        %396 = vxpose.xlu0.b32.cont [11/16] 0.0, 128
        %397 = vxpose.xlu0.b32.cont [12/16] 0.0, 128
        %398 = vxpose.xlu0.b32.cont [13/16] 0.0, 128
        %399 = vxpose.xlu0.b32.cont [14/16] 0.0, 128
        %400 = vxpose.xlu0.b32.cont [15/16] 0.0, 128
        %401 = vxpose.xlu0.b32.end [16/16] 0.0, 128
        %v402 = vpop.trf.xlu0
        %v403 = vpop.trf.xlu0
        %v404 = vpop.trf.xlu0
        %v405 = vpop.trf.xlu0
        %v406 = vpop.trf.xlu0
        %v407 = vpop.trf.xlu0
        %v408 = vpop.trf.xlu0
        %v409 = vpop.trf.xlu0
        %v410 = vpop.trf.xlu0
        %v411 = vpop.trf.xlu0
        %v412 = vpop.trf.xlu0
        %v413 = vpop.trf.xlu0
        %v414 = vpop.trf.xlu0
        %v415 = vpop.trf.xlu0
        %v416 = vpop.trf.xlu0
        %v417 = vpop.trf.xlu0
        %418 = vxpose.xlu0.b32.start [1/16] %v384, 128
        %419 = vxpose.xlu0.b32.cont [2/16] 0.0, 128
        %420 = vxpose.xlu0.b32.cont [3/16] 0.0, 128
        %421 = vxpose.xlu0.b32.cont [4/16] 0.0, 128
        %422 = vxpose.xlu0.b32.cont [5/16] 0.0, 128
        %423 = vxpose.xlu0.b32.cont [6/16] 0.0, 128
        %424 = vxpose.xlu0.b32.cont [7/16] 0.0, 128
        %425 = vxpose.xlu0.b32.cont [8/16] 0.0, 128
        %426 = vxpose.xlu0.b32.cont [9/16] 0.0, 128
        %427 = vxpose.xlu0.b32.cont [10/16] 0.0, 128
        %428 = vxpose.xlu0.b32.cont [11/16] 0.0, 128
        %429 = vxpose.xlu0.b32.cont [12/16] 0.0, 128
        %430 = vxpose.xlu0.b32.cont [13/16] 0.0, 128
        %431 = vxpose.xlu0.b32.cont [14/16] 0.0, 128
        %432 = vxpose.xlu0.b32.cont [15/16] 0.0, 128
        %433 = vxpose.xlu0.b32.end [16/16] 0.0, 128
        %v434 = vpop.trf.xlu0
        %v435 = vpop.trf.xlu0
        %v436 = vpop.trf.xlu0
        %v437 = vpop.trf.xlu0
        %v438 = vpop.trf.xlu0
        %v439 = vpop.trf.xlu0
        %v440 = vpop.trf.xlu0
        %v441 = vpop.trf.xlu0
        %v442 = vpop.trf.xlu0
        %v443 = vpop.trf.xlu0
        %v444 = vpop.trf.xlu0
        %v445 = vpop.trf.xlu0
        %v446 = vpop.trf.xlu0
        %v447 = vpop.trf.xlu0
        %v448 = vpop.trf.xlu0
        %v449 = vpop.trf.xlu0
        %vm450 = vcmask 64512
        %v452 = vsel %vm450, %v402, 0
        %v455 = vsel %vm450, %v403, 0
        %v458 = vsel %vm450, %v404, 0
        %v461 = vsel %vm450, %v405, 0
        %v464 = vsel %vm450, %v406, 0
        %v467 = vsel %vm450, %v407, 0
        %v470 = vsel %vm450, %v408, 0
        %v473 = vsel %vm450, %v409, 0
        %v476 = vsel %vm450, %v410, 0
        %v479 = vsel %vm450, %v411, 0
        %v482 = vsel %vm450, %v412, 0
        %v485 = vsel %vm450, %v413, 0
        %v488 = vsel %vm450, %v414, 0
        %v491 = vsel %vm450, %v415, 0
        %v494 = vsel %vm450, %v416, 0
        %v497 = vsel %vm450, %v417, 0
        %v500 = vsel %vm450, %v434, 0
        %v503 = vsel %vm450, %v435, 0
        %v506 = vsel %vm450, %v436, 0
        %v509 = vsel %vm450, %v437, 0
        %v512 = vsel %vm450, %v438, 0
        %v515 = vsel %vm450, %v439, 0
        %v518 = vsel %vm450, %v440, 0
        %v521 = vsel %vm450, %v441, 0
        %v524 = vsel %vm450, %v442, 0
        %v527 = vsel %vm450, %v443, 0
        %v530 = vsel %vm450, %v444, 0
        %v533 = vsel %vm450, %v445, 0
        %v536 = vsel %vm450, %v446, 0
        %v539 = vsel %vm450, %v447, 0
        %v542 = vsel %vm450, %v448, 0
        %v545 = vsel %vm450, %v449, 0
        %547 = vmatprep.subr.mxu0 0.0
        %v548 = vand.u32 %v385, 4294901760
        %549 = vmatpush1.msra.mxu0 %v548
        %550 = vmatprep.subr.mxu0 0.0
        %551 = vmatpush1.msra.mxu0 0.0
        %552 = vmatprep.subr.mxu0 0.0
        %553 = vmatpush1.msra.mxu0 0.0
        %554 = vmatprep.subr.mxu0 0.0
        %555 = vmatpush1.msra.mxu0 0.0
        %556 = vmatprep.subr.mxu0 0.0
        %557 = vmatpush1.msra.mxu0 0.0
        %558 = vmatprep.subr.mxu0 0.0
        %559 = vmatpush1.msra.mxu0 0.0
        %560 = vmatprep.subr.mxu0 0.0
        %561 = vmatpush1.msra.mxu0 0.0
        %562 = vmatprep.subr.mxu0 0.0
        %563 = vmatpush1.msra.mxu0 0.0
        %564 = vmatprep.subr.mxu0 0.0
        %565 = vmatpush1.msra.mxu0 0.0
        %566 = vmatprep.subr.mxu0 0.0
        %567 = vmatpush1.msra.mxu0 0.0
        %568 = vmatprep.subr.mxu0 0.0
        %569 = vmatpush1.msra.mxu0 0.0
        %570 = vmatprep.subr.mxu0 0.0
        %571 = vmatpush1.msra.mxu0 0.0
        %572 = vmatprep.subr.mxu0 0.0
        %573 = vmatpush1.msra.mxu0 0.0
        %574 = vmatprep.subr.mxu0 0.0
        %575 = vmatpush1.msra.mxu0 0.0
        %576 = vmatprep.subr.mxu0 0.0
        %577 = vmatpush1.msra.mxu0 0.0
        %578 = vmatprep.subr.mxu0 0.0
        %579 = vmatpush1.msra.mxu0 0.0
        %580 = vmatprep.subr.mxu0 0.0
        %581 = vmatpush1.msra.mxu0 0.0
        %582 = vmatprep.subr.mxu0 0.0
        %583 = vmatpush1.msra.mxu0 0.0
        %584 = vmatprep.subr.mxu0 0.0
        %585 = vmatpush1.msra.mxu0 0.0
        %586 = vmatprep.subr.mxu0 0.0
        %587 = vmatpush1.msra.mxu0 0.0
        %588 = vmatprep.subr.mxu0 0.0
        %589 = vmatpush1.msra.mxu0 0.0
        %590 = vmatprep.subr.mxu0 0.0
        %591 = vmatpush1.msra.mxu0 0.0
        %592 = vmatprep.subr.mxu0 0.0
        %593 = vmatpush1.msra.mxu0 0.0
        %594 = vmatprep.subr.mxu0 0.0
        %595 = vmatpush1.msra.mxu0 0.0
        %596 = vmatprep.subr.mxu0 0.0
        %597 = vmatpush1.msra.mxu0 0.0
        %598 = vmatprep.subr.mxu0 0.0
        %599 = vmatpush1.msra.mxu0 0.0
        %600 = vmatprep.subr.mxu0 0.0
        %601 = vmatpush1.msra.mxu0 0.0
        %602 = vmatprep.subr.mxu0 0.0
        %603 = vmatpush1.msra.mxu0 0.0
        %604 = vmatprep.subr.mxu0 0.0
        %605 = vmatpush1.msra.mxu0 0.0
        %606 = vmatprep.subr.mxu0 0.0
        %607 = vmatpush1.msra.mxu0 0.0
        %608 = vmatprep.subr.mxu0 0.0
        %609 = vmatpush1.msra.mxu0 0.0
        %610 = vmatprep.subr.mxu0 0.0
        %611 = vmatpush1.msra.mxu0 0.0
        %612 = vmatprep.mubr.f32.mxu0 0.0
        %v613 = vand.u32 %v452, 4294901760
        %v614 = vsub.f32 %v452, %v613
        %v615 = vand.u32 %v614, 4294901760
        %v616 = vsub.f32 %v614, %v615
        %v617 = vand.u32 %v616, 4294901760
        %618 = vmatmul.mubr.f32.gmra.mrb[0].mxu0 %v617
        %v619 = vpop.f32.mrb[0].mxu0
        %v620 = vadd.f32 0.0, %v619
        %v621 = vpop.f32.mrb[0].mxu0
        %622 = vmatprep.mubr.f32.mxu0 0.0
        %v623 = vand.u32 %v455, 4294901760
        %v624 = vsub.f32 %v455, %v623
        %v625 = vand.u32 %v624, 4294901760
        %v626 = vsub.f32 %v624, %v625
        %v627 = vand.u32 %v626, 4294901760
        %628 = vmatmul.mubr.f32.gmra.mrb[0].mxu0 %v627
        %v629 = vpop.f32.mrb[0].mxu0
        %v630 = vadd.f32 0.0, %v629
        %v631 = vpop.f32.mrb[0].mxu0
        %632 = vmatprep.mubr.f32.mxu0 0.0
        %v633 = vand.u32 %v458, 4294901760
        %v634 = vsub.f32 %v458, %v633
        %v635 = vand.u32 %v634, 4294901760
        %v636 = vsub.f32 %v634, %v635
        %v637 = vand.u32 %v636, 4294901760
        %638 = vmatmul.mubr.f32.gmra.mrb[0].mxu0 %v637
        %v639 = vpop.f32.mrb[0].mxu0
        %v640 = vadd.f32 0.0, %v639
        %v641 = vpop.f32.mrb[0].mxu0
        %642 = vmatprep.mubr.f32.mxu0 0.0
        %v643 = vand.u32 %v461, 4294901760
        %v644 = vsub.f32 %v461, %v643
        %v645 = vand.u32 %v644, 4294901760
        %v646 = vsub.f32 %v644, %v645
        %v647 = vand.u32 %v646, 4294901760
        %648 = vmatmul.mubr.f32.gmra.mrb[0].mxu0 %v647
        %v649 = vpop.f32.mrb[0].mxu0
        %v650 = vadd.f32 0.0, %v649
        %v651 = vpop.f32.mrb[0].mxu0
        %652 = vmatprep.mubr.f32.mxu0 0.0
        %v653 = vand.u32 %v464, 4294901760
        %v654 = vsub.f32 %v464, %v653
        %v655 = vand.u32 %v654, 4294901760
        %v656 = vsub.f32 %v654, %v655
        %v657 = vand.u32 %v656, 4294901760
        %658 = vmatmul.mubr.f32.gmra.mrb[0].mxu0 %v657
        %v659 = vpop.f32.mrb[0].mxu0
        %v660 = vadd.f32 0.0, %v659
        %v661 = vpop.f32.mrb[0].mxu0
        %662 = vmatprep.mubr.f32.mxu0 0.0
        %v663 = vand.u32 %v467, 4294901760
        %v664 = vsub.f32 %v467, %v663
        %v665 = vand.u32 %v664, 4294901760
        %v666 = vsub.f32 %v664, %v665
        %v667 = vand.u32 %v666, 4294901760
        %668 = vmatmul.mubr.f32.gmra.mrb[0].mxu0 %v667
        %v669 = vpop.f32.mrb[0].mxu0
        %v670 = vadd.f32 0.0, %v669
        %v671 = vpop.f32.mrb[0].mxu0
        %672 = vmatprep.mubr.f32.mxu0 0.0
        %v673 = vand.u32 %v470, 4294901760
        %v674 = vsub.f32 %v470, %v673
        %v675 = vand.u32 %v674, 4294901760
        %v676 = vsub.f32 %v674, %v675
        %v677 = vand.u32 %v676, 4294901760
        %678 = vmatmul.mubr.f32.gmra.mrb[0].mxu0 %v677
        %v679 = vpop.f32.mrb[0].mxu0
        %v680 = vadd.f32 0.0, %v679
        %v681 = vpop.f32.mrb[0].mxu0
        %682 = vmatprep.mubr.f32.mxu0 0.0
        %v683 = vand.u32 %v473, 4294901760
        %v684 = vsub.f32 %v473, %v683
        %v685 = vand.u32 %v684, 4294901760
        %v686 = vsub.f32 %v684, %v685
        %v687 = vand.u32 %v686, 4294901760
        %688 = vmatmul.mubr.f32.gmra.mrb[0].mxu0 %v687
        %v689 = vpop.f32.mrb[0].mxu0
        %v690 = vadd.f32 0.0, %v689
        %v691 = vpop.f32.mrb[0].mxu0
        %692 = vmatprep.mubr.f32.mxu0 0.0
        %v693 = vand.u32 %v476, 4294901760
        %v694 = vsub.f32 %v476, %v693
        %v695 = vand.u32 %v694, 4294901760
        %v696 = vsub.f32 %v694, %v695
        %v697 = vand.u32 %v696, 4294901760
        %698 = vmatmul.mubr.f32.gmra.mrb[0].mxu0 %v697
        %v699 = vpop.f32.mrb[0].mxu0
        %v700 = vadd.f32 0.0, %v699
        %v701 = vpop.f32.mrb[0].mxu0
        %702 = vmatprep.mubr.f32.mxu0 0.0
        %v703 = vand.u32 %v479, 4294901760
        %v704 = vsub.f32 %v479, %v703
        %v705 = vand.u32 %v704, 4294901760
        %v706 = vsub.f32 %v704, %v705
        %v707 = vand.u32 %v706, 4294901760
        %708 = vmatmul.mubr.f32.gmra.mrb[0].mxu0 %v707
        %v709 = vpop.f32.mrb[0].mxu0
        %v710 = vadd.f32 0.0, %v709
        %v711 = vpop.f32.mrb[0].mxu0
        %712 = vmatprep.mubr.f32.mxu0 0.0
        %v713 = vand.u32 %v482, 4294901760
        %v714 = vsub.f32 %v482, %v713
        %v715 = vand.u32 %v714, 4294901760
        %v716 = vsub.f32 %v714, %v715
        %v717 = vand.u32 %v716, 4294901760
        %718 = vmatmul.mubr.f32.gmra.mrb[0].mxu0 %v717
        %v719 = vpop.f32.mrb[0].mxu0
        %v720 = vadd.f32 0.0, %v719
        %v721 = vpop.f32.mrb[0].mxu0
        %722 = vmatprep.mubr.f32.mxu0 0.0
        %v723 = vand.u32 %v485, 4294901760
        %v724 = vsub.f32 %v485, %v723
        %v725 = vand.u32 %v724, 4294901760
        %v726 = vsub.f32 %v724, %v725
        %v727 = vand.u32 %v726, 4294901760
        %728 = vmatmul.mubr.f32.gmra.mrb[0].mxu0 %v727
        %v729 = vpop.f32.mrb[0].mxu0
        %v730 = vadd.f32 0.0, %v729
        %v731 = vpop.f32.mrb[0].mxu0
        %732 = vmatprep.mubr.f32.mxu0 0.0
        %v733 = vand.u32 %v488, 4294901760
        %v734 = vsub.f32 %v488, %v733
        %v735 = vand.u32 %v734, 4294901760
        %v736 = vsub.f32 %v734, %v735
        %v737 = vand.u32 %v736, 4294901760
        %738 = vmatmul.mubr.f32.gmra.mrb[0].mxu0 %v737
        %v739 = vpop.f32.mrb[0].mxu0
        %v740 = vadd.f32 0.0, %v739
        %v741 = vpop.f32.mrb[0].mxu0
        %742 = vmatprep.mubr.f32.mxu0 0.0
        %v743 = vand.u32 %v491, 4294901760
        %v744 = vsub.f32 %v491, %v743
        %v745 = vand.u32 %v744, 4294901760
        %v746 = vsub.f32 %v744, %v745
        %v747 = vand.u32 %v746, 4294901760
        %748 = vmatmul.mubr.f32.gmra.mrb[0].mxu0 %v747
        %v749 = vpop.f32.mrb[0].mxu0
        %v750 = vadd.f32 0.0, %v749
        %v751 = vpop.f32.mrb[0].mxu0
        %752 = vmatprep.mubr.f32.mxu0 0.0
        %v753 = vand.u32 %v494, 4294901760
        %v754 = vsub.f32 %v494, %v753
        %v755 = vand.u32 %v754, 4294901760
        %v756 = vsub.f32 %v754, %v755
        %v757 = vand.u32 %v756, 4294901760
        %758 = vmatmul.mubr.f32.gmra.mrb[0].mxu0 %v757
        %v759 = vpop.f32.mrb[0].mxu0
        %v760 = vadd.f32 0.0, %v759
        %v761 = vpop.f32.mrb[0].mxu0
        %762 = vmatprep.mubr.f32.mxu0 0.0
        %v763 = vand.u32 %v497, 4294901760
        %v764 = vsub.f32 %v497, %v763
        %v765 = vand.u32 %v764, 4294901760
        %v766 = vsub.f32 %v764, %v765
        %v767 = vand.u32 %v766, 4294901760
        %768 = vmatmul.mubr.f32.gmra.mrb[0].mxu0 %v767
        %v769 = vpop.f32.mrb[0].mxu0
        %v770 = vadd.f32 0.0, %v769
        %v771 = vpop.f32.mrb[0].mxu0
        %772 = vmatprep.mubr.f32.mxu0 0.0
        %v773 = vand.u32 %v500, 4294901760
        %v774 = vsub.f32 %v500, %v773
        %v775 = vand.u32 %v774, 4294901760
        %v776 = vsub.f32 %v774, %v775
        %v777 = vand.u32 %v776, 4294901760
        %778 = vmatmul.mubr.f32.gmra.mrb[0].mxu0 %v777
        %v779 = vpop.f32.mrb[0].mxu0
        %v780 = vadd.f32 0.0, %v779
        %v781 = vpop.f32.mrb[0].mxu0
        %782 = vmatprep.mubr.f32.mxu0 0.0
        %v783 = vand.u32 %v503, 4294901760
        %v784 = vsub.f32 %v503, %v783
        %v785 = vand.u32 %v784, 4294901760
        %v786 = vsub.f32 %v784, %v785
        %v787 = vand.u32 %v786, 4294901760
        %788 = vmatmul.mubr.f32.gmra.mrb[0].mxu0 %v787
        %v789 = vpop.f32.mrb[0].mxu0
        %v790 = vadd.f32 0.0, %v789
        %v791 = vpop.f32.mrb[0].mxu0
        %792 = vmatprep.mubr.f32.mxu0 0.0
        %v793 = vand.u32 %v506, 4294901760
        %v794 = vsub.f32 %v506, %v793
        %v795 = vand.u32 %v794, 4294901760
        %v796 = vsub.f32 %v794, %v795
        %v797 = vand.u32 %v796, 4294901760
        %798 = vmatmul.mubr.f32.gmra.mrb[0].mxu0 %v797
        %v799 = vpop.f32.mrb[0].mxu0
        %v800 = vadd.f32 0.0, %v799
        %v801 = vpop.f32.mrb[0].mxu0
        %802 = vmatprep.mubr.f32.mxu0 0.0
        %v803 = vand.u32 %v509, 4294901760
        %v804 = vsub.f32 %v509, %v803
        %v805 = vand.u32 %v804, 4294901760
        %v806 = vsub.f32 %v804, %v805
        %v807 = vand.u32 %v806, 4294901760
        %808 = vmatmul.mubr.f32.gmra.mrb[0].mxu0 %v807
        %v809 = vpop.f32.mrb[0].mxu0
        %v810 = vadd.f32 0.0, %v809
        %v811 = vpop.f32.mrb[0].mxu0
        %812 = vmatprep.mubr.f32.mxu0 0.0
        %v813 = vand.u32 %v512, 4294901760
        %v814 = vsub.f32 %v512, %v813
        %v815 = vand.u32 %v814, 4294901760
        %v816 = vsub.f32 %v814, %v815
        %v817 = vand.u32 %v816, 4294901760
        %818 = vmatmul.mubr.f32.gmra.mrb[0].mxu0 %v817
        %v819 = vpop.f32.mrb[0].mxu0
        %v820 = vadd.f32 0.0, %v819
        %v821 = vpop.f32.mrb[0].mxu0
        %822 = vmatprep.mubr.f32.mxu0 0.0
        %v823 = vand.u32 %v515, 4294901760
        %v824 = vsub.f32 %v515, %v823
        %v825 = vand.u32 %v824, 4294901760
        %v826 = vsub.f32 %v824, %v825
        %v827 = vand.u32 %v826, 4294901760
        %828 = vmatmul.mubr.f32.gmra.mrb[0].mxu0 %v827
        %v829 = vpop.f32.mrb[0].mxu0
        %v830 = vadd.f32 0.0, %v829
        %v831 = vpop.f32.mrb[0].mxu0
        %832 = vmatprep.mubr.f32.mxu0 0.0
        %v833 = vand.u32 %v518, 4294901760
        %v834 = vsub.f32 %v518, %v833
        %v835 = vand.u32 %v834, 4294901760
        %v836 = vsub.f32 %v834, %v835
        %v837 = vand.u32 %v836, 4294901760
        %838 = vmatmul.mubr.f32.gmra.mrb[0].mxu0 %v837
        %v839 = vpop.f32.mrb[0].mxu0
        %v840 = vadd.f32 0.0, %v839
        %v841 = vpop.f32.mrb[0].mxu0
        %842 = vmatprep.mubr.f32.mxu0 0.0
        %v843 = vand.u32 %v521, 4294901760
        %v844 = vsub.f32 %v521, %v843
        %v845 = vand.u32 %v844, 4294901760
        %v846 = vsub.f32 %v844, %v845
        %v847 = vand.u32 %v846, 4294901760
        %848 = vmatmul.mubr.f32.gmra.mrb[0].mxu0 %v847
        %v849 = vpop.f32.mrb[0].mxu0
        %v850 = vadd.f32 0.0, %v849
        %v851 = vpop.f32.mrb[0].mxu0
        %852 = vmatprep.mubr.f32.mxu0 0.0
        %v853 = vand.u32 %v524, 4294901760
        %v854 = vsub.f32 %v524, %v853
        %v855 = vand.u32 %v854, 4294901760
        %v856 = vsub.f32 %v854, %v855
        %v857 = vand.u32 %v856, 4294901760
        %858 = vmatmul.mubr.f32.gmra.mrb[0].mxu0 %v857
        %v859 = vpop.f32.mrb[0].mxu0
        %v860 = vadd.f32 0.0, %v859
        %v861 = vpop.f32.mrb[0].mxu0
        %862 = vmatprep.mubr.f32.mxu0 0.0
        %v863 = vand.u32 %v527, 4294901760
        %v864 = vsub.f32 %v527, %v863
        %v865 = vand.u32 %v864, 4294901760
        %v866 = vsub.f32 %v864, %v865
        %v867 = vand.u32 %v866, 4294901760
        %868 = vmatmul.mubr.f32.gmra.mrb[0].mxu0 %v867
        %v869 = vpop.f32.mrb[0].mxu0
        %v870 = vadd.f32 0.0, %v869
        %v871 = vpop.f32.mrb[0].mxu0
        %872 = vmatprep.mubr.f32.mxu0 0.0
        %v873 = vand.u32 %v530, 4294901760
        %v874 = vsub.f32 %v530, %v873
        %v875 = vand.u32 %v874, 4294901760
        %v876 = vsub.f32 %v874, %v875
        %v877 = vand.u32 %v876, 4294901760
        %878 = vmatmul.mubr.f32.gmra.mrb[0].mxu0 %v877
        %v879 = vpop.f32.mrb[0].mxu0
        %v880 = vadd.f32 0.0, %v879
        %v881 = vpop.f32.mrb[0].mxu0
        %882 = vmatprep.mubr.f32.mxu0 0.0
        %v883 = vand.u32 %v533, 4294901760
        %v884 = vsub.f32 %v533, %v883
        %v885 = vand.u32 %v884, 4294901760
        %v886 = vsub.f32 %v884, %v885
        %v887 = vand.u32 %v886, 4294901760
        %888 = vmatmul.mubr.f32.gmra.mrb[0].mxu0 %v887
        %v889 = vpop.f32.mrb[0].mxu0
        %v890 = vadd.f32 0.0, %v889
        %v891 = vpop.f32.mrb[0].mxu0
        %892 = vmatprep.mubr.f32.mxu0 0.0
        %v893 = vand.u32 %v536, 4294901760
        %v894 = vsub.f32 %v536, %v893
        %v895 = vand.u32 %v894, 4294901760
        %v896 = vsub.f32 %v894, %v895
        %v897 = vand.u32 %v896, 4294901760
        %898 = vmatmul.mubr.f32.gmra.mrb[0].mxu0 %v897
        %v899 = vpop.f32.mrb[0].mxu0
        %v900 = vadd.f32 0.0, %v899
        %v901 = vpop.f32.mrb[0].mxu0
        %902 = vmatprep.mubr.f32.mxu0 0.0
        %v903 = vand.u32 %v539, 4294901760
        %v904 = vsub.f32 %v539, %v903
        %v905 = vand.u32 %v904, 4294901760
        %v906 = vsub.f32 %v904, %v905
        %v907 = vand.u32 %v906, 4294901760
        %908 = vmatmul.mubr.f32.gmra.mrb[0].mxu0 %v907
        %v909 = vpop.f32.mrb[0].mxu0
        %v910 = vadd.f32 0.0, %v909
        %v911 = vpop.f32.mrb[0].mxu0
        %912 = vmatprep.mubr.f32.mxu0 0.0
        %v913 = vand.u32 %v542, 4294901760
        %v914 = vsub.f32 %v542, %v913
        %v915 = vand.u32 %v914, 4294901760
        %v916 = vsub.f32 %v914, %v915
        %v917 = vand.u32 %v916, 4294901760
        %918 = vmatmul.mubr.f32.gmra.mrb[0].mxu0 %v917
        %v919 = vpop.f32.mrb[0].mxu0
        %v920 = vadd.f32 0.0, %v919
        %v921 = vpop.f32.mrb[0].mxu0
        %922 = vmatprep.mubr.f32.mxu0 0.0
        %v923 = vand.u32 %v545, 4294901760
        %v924 = vsub.f32 %v545, %v923
        %v925 = vand.u32 %v924, 4294901760
        %v926 = vsub.f32 %v924, %v925
        %v927 = vand.u32 %v926, 4294901760
        %928 = vmatmul.mubr.f32.gmra.mrb[0].mxu0 %v927
        %v929 = vpop.f32.mrb[0].mxu0
        %v930 = vadd.f32 0.0, %v929
        %v931 = vpop.f32.mrb[0].mxu0
        %932 = vdwg.mxu0
        %933 = vmatprep.subr.mxu0 0.0
        %v934 = vand.u32 %v385, 4294901760
        %v935 = vsub.f32 %v385, %v934
        %v936 = vand.u32 %v935, 4294901760
        %v937 = vsub.f32 %v935, %v936
        %v938 = vand.u32 %v937, 4294901760
        %939 = vmatpush1.msra.mxu0 %v938
        %940 = vmatprep.subr.mxu0 0.0
        %941 = vmatpush1.msra.mxu0 0.0
        %942 = vmatprep.subr.mxu0 0.0
        %943 = vmatpush1.msra.mxu0 0.0
        %944 = vmatprep.subr.mxu0 0.0
        %945 = vmatpush1.msra.mxu0 0.0
        %946 = vmatprep.subr.mxu0 0.0
        %947 = vmatpush1.msra.mxu0 0.0
        %948 = vmatprep.subr.mxu0 0.0
        %949 = vmatpush1.msra.mxu0 0.0
        %950 = vmatprep.subr.mxu0 0.0
        %951 = vmatpush1.msra.mxu0 0.0
        %952 = vmatprep.subr.mxu0 0.0
        %953 = vmatpush1.msra.mxu0 0.0
        %954 = vmatprep.subr.mxu0 0.0
        %955 = vmatpush1.msra.mxu0 0.0
        %956 = vmatprep.subr.mxu0 0.0
        %957 = vmatpush1.msra.mxu0 0.0
        %958 = vmatprep.subr.mxu0 0.0
        %959 = vmatpush1.msra.mxu0 0.0
        %960 = vmatprep.subr.mxu0 0.0
        %961 = vmatpush1.msra.mxu0 0.0
        %962 = vmatprep.subr.mxu0 0.0
        %963 = vmatpush1.msra.mxu0 0.0
        %964 = vmatprep.subr.mxu0 0.0
        %965 = vmatpush1.msra.mxu0 0.0
        %966 = vmatprep.subr.mxu0 0.0
        %967 = vmatpush1.msra.mxu0 0.0
        %968 = vmatprep.subr.mxu0 0.0
        %969 = vmatpush1.msra.mxu0 0.0
        %970 = vmatprep.subr.mxu0 0.0
        %971 = vmatpush1.msra.mxu0 0.0
        %972 = vmatprep.subr.mxu0 0.0
        %973 = vmatpush1.msra.mxu0 0.0
        %974 = vmatprep.subr.mxu0 0.0
        %975 = vmatpush1.msra.mxu0 0.0
        %976 = vmatprep.subr.mxu0 0.0
        %977 = vmatpush1.msra.mxu0 0.0
        %978 = vmatprep.subr.mxu0 0.0
        %979 = vmatpush1.msra.mxu0 0.0
        %980 = vmatprep.subr.mxu0 0.0
        %981 = vmatpush1.msra.mxu0 0.0
        %982 = vmatprep.subr.mxu0 0.0
        %983 = vmatpush1.msra.mxu0 0.0
        %984 = vmatprep.subr.mxu0 0.0
        %985 = vmatpush1.msra.mxu0 0.0
        %986 = vmatprep.subr.mxu0 0.0
        %987 = vmatpush1.msra.mxu0 0.0
        %988 = vmatprep.subr.mxu0 0.0
        %989 = vmatpush1.msra.mxu0 0.0
        %990 = vmatprep.subr.mxu0 0.0
        %991 = vmatpush1.msra.mxu0 0.0
        %992 = vmatprep.subr.mxu0 0.0
        %993 = vmatpush1.msra.mxu0 0.0
        %994 = vmatprep.subr.mxu0 0.0
        %995 = vmatpush1.msra.mxu0 0.0
        %996 = vmatprep.subr.mxu0 0.0
        %997 = vmatpush1.msra.mxu0 0.0
        %998 = vmatprep.subr.mxu0 0.0
        %999 = vmatpush1.msra.mxu0 0.0
        %1000 = vmatprep.subr.mxu0 0.0
        %1001 = vmatpush1.msra.mxu0 0.0
        %1002 = vmatprep.mubr.f32.mxu0 0.0
        %v1003 = vand.u32 %v452, 4294901760
        %1004 = vmatmul.mubr.f32.gmra.mrb[0].mxu0 %v1003
        %v1005 = vpop.f32.mrb[0].mxu0
        %v1006 = vadd.f32 %v620, %v1005
        %v1007 = vpop.f32.mrb[0].mxu0
        %1008 = vmatprep.mubr.f32.mxu0 0.0
        %v1009 = vand.u32 %v455, 4294901760
        %1010 = vmatmul.mubr.f32.gmra.mrb[0].mxu0 %v1009
        %v1011 = vpop.f32.mrb[0].mxu0
        %v1012 = vadd.f32 %v630, %v1011
        %v1013 = vpop.f32.mrb[0].mxu0
        %1014 = vmatprep.mubr.f32.mxu0 0.0
        %v1015 = vand.u32 %v458, 4294901760
        %1016 = vmatmul.mubr.f32.gmra.mrb[0].mxu0 %v1015
        %v1017 = vpop.f32.mrb[0].mxu0
        %v1018 = vadd.f32 %v640, %v1017
        %v1019 = vpop.f32.mrb[0].mxu0
        %1020 = vmatprep.mubr.f32.mxu0 0.0
        %v1021 = vand.u32 %v461, 4294901760
        %1022 = vmatmul.mubr.f32.gmra.mrb[0].mxu0 %v1021
        %v1023 = vpop.f32.mrb[0].mxu0
        %v1024 = vadd.f32 %v650, %v1023
        %v1025 = vpop.f32.mrb[0].mxu0
        %1026 = vmatprep.mubr.f32.mxu0 0.0
        %v1027 = vand.u32 %v464, 4294901760
        %1028 = vmatmul.mubr.f32.gmra.mrb[0].mxu0 %v1027
        %v1029 = vpop.f32.mrb[0].mxu0
        %v1030 = vadd.f32 %v660, %v1029
        %v1031 = vpop.f32.mrb[0].mxu0
        %1032 = vmatprep.mubr.f32.mxu0 0.0
        %v1033 = vand.u32 %v467, 4294901760
        %1034 = vmatmul.mubr.f32.gmra.mrb[0].mxu0 %v1033
        %v1035 = vpop.f32.mrb[0].mxu0
        %v1036 = vadd.f32 %v670, %v1035
        %v1037 = vpop.f32.mrb[0].mxu0
        %1038 = vmatprep.mubr.f32.mxu0 0.0
        %v1039 = vand.u32 %v470, 4294901760
        %1040 = vmatmul.mubr.f32.gmra.mrb[0].mxu0 %v1039
        %v1041 = vpop.f32.mrb[0].mxu0
        %v1042 = vadd.f32 %v680, %v1041
        %v1043 = vpop.f32.mrb[0].mxu0
        %1044 = vmatprep.mubr.f32.mxu0 0.0
        %v1045 = vand.u32 %v473, 4294901760
        %1046 = vmatmul.mubr.f32.gmra.mrb[0].mxu0 %v1045
        %v1047 = vpop.f32.mrb[0].mxu0
        %v1048 = vadd.f32 %v690, %v1047
        %v1049 = vpop.f32.mrb[0].mxu0
        %1050 = vmatprep.mubr.f32.mxu0 0.0
        %v1051 = vand.u32 %v476, 4294901760
        %1052 = vmatmul.mubr.f32.gmra.mrb[0].mxu0 %v1051
        %v1053 = vpop.f32.mrb[0].mxu0
        %v1054 = vadd.f32 %v700, %v1053
        %v1055 = vpop.f32.mrb[0].mxu0
        %1056 = vmatprep.mubr.f32.mxu0 0.0
        %v1057 = vand.u32 %v479, 4294901760
        %1058 = vmatmul.mubr.f32.gmra.mrb[0].mxu0 %v1057
        %v1059 = vpop.f32.mrb[0].mxu0
        %v1060 = vadd.f32 %v710, %v1059
        %v1061 = vpop.f32.mrb[0].mxu0
        %1062 = vmatprep.mubr.f32.mxu0 0.0
        %v1063 = vand.u32 %v482, 4294901760
        %1064 = vmatmul.mubr.f32.gmra.mrb[0].mxu0 %v1063
        %v1065 = vpop.f32.mrb[0].mxu0
        %v1066 = vadd.f32 %v720, %v1065
        %v1067 = vpop.f32.mrb[0].mxu0
        %1068 = vmatprep.mubr.f32.mxu0 0.0
        %v1069 = vand.u32 %v485, 4294901760
        %1070 = vmatmul.mubr.f32.gmra.mrb[0].mxu0 %v1069
        %v1071 = vpop.f32.mrb[0].mxu0
        %v1072 = vadd.f32 %v730, %v1071
        %v1073 = vpop.f32.mrb[0].mxu0
        %1074 = vmatprep.mubr.f32.mxu0 0.0
        %v1075 = vand.u32 %v488, 4294901760
        %1076 = vmatmul.mubr.f32.gmra.mrb[0].mxu0 %v1075
        %v1077 = vpop.f32.mrb[0].mxu0
        %v1078 = vadd.f32 %v740, %v1077
        %v1079 = vpop.f32.mrb[0].mxu0
        %1080 = vmatprep.mubr.f32.mxu0 0.0
        %v1081 = vand.u32 %v491, 4294901760
        %1082 = vmatmul.mubr.f32.gmra.mrb[0].mxu0 %v1081
        %v1083 = vpop.f32.mrb[0].mxu0
        %v1084 = vadd.f32 %v750, %v1083
        %v1085 = vpop.f32.mrb[0].mxu0
        %1086 = vmatprep.mubr.f32.mxu0 0.0
        %v1087 = vand.u32 %v494, 4294901760
        %1088 = vmatmul.mubr.f32.gmra.mrb[0].mxu0 %v1087
        %v1089 = vpop.f32.mrb[0].mxu0
        %v1090 = vadd.f32 %v760, %v1089
        %v1091 = vpop.f32.mrb[0].mxu0
        %1092 = vmatprep.mubr.f32.mxu0 0.0
        %v1093 = vand.u32 %v497, 4294901760
        %1094 = vmatmul.mubr.f32.gmra.mrb[0].mxu0 %v1093
        %v1095 = vpop.f32.mrb[0].mxu0
        %v1096 = vadd.f32 %v770, %v1095
        %v1097 = vpop.f32.mrb[0].mxu0
        %1098 = vmatprep.mubr.f32.mxu0 0.0
        %v1099 = vand.u32 %v500, 4294901760
        %1100 = vmatmul.mubr.f32.gmra.mrb[0].mxu0 %v1099
        %v1101 = vpop.f32.mrb[0].mxu0
        %v1102 = vadd.f32 %v780, %v1101
        %v1103 = vpop.f32.mrb[0].mxu0
        %1104 = vmatprep.mubr.f32.mxu0 0.0
        %v1105 = vand.u32 %v503, 4294901760
        %1106 = vmatmul.mubr.f32.gmra.mrb[0].mxu0 %v1105
        %v1107 = vpop.f32.mrb[0].mxu0
        %v1108 = vadd.f32 %v790, %v1107
        %v1109 = vpop.f32.mrb[0].mxu0
        %1110 = vmatprep.mubr.f32.mxu0 0.0
        %v1111 = vand.u32 %v506, 4294901760
        %1112 = vmatmul.mubr.f32.gmra.mrb[0].mxu0 %v1111
        %v1113 = vpop.f32.mrb[0].mxu0
        %v1114 = vadd.f32 %v800, %v1113
        %v1115 = vpop.f32.mrb[0].mxu0
        %1116 = vmatprep.mubr.f32.mxu0 0.0
        %v1117 = vand.u32 %v509, 4294901760
        %1118 = vmatmul.mubr.f32.gmra.mrb[0].mxu0 %v1117
        %v1119 = vpop.f32.mrb[0].mxu0
        %v1120 = vadd.f32 %v810, %v1119
        %v1121 = vpop.f32.mrb[0].mxu0
        %1122 = vmatprep.mubr.f32.mxu0 0.0
        %v1123 = vand.u32 %v512, 4294901760
        %1124 = vmatmul.mubr.f32.gmra.mrb[0].mxu0 %v1123
        %v1125 = vpop.f32.mrb[0].mxu0
        %v1126 = vadd.f32 %v820, %v1125
        %v1127 = vpop.f32.mrb[0].mxu0
        %1128 = vmatprep.mubr.f32.mxu0 0.0
        %v1129 = vand.u32 %v515, 4294901760
        %1130 = vmatmul.mubr.f32.gmra.mrb[0].mxu0 %v1129
        %v1131 = vpop.f32.mrb[0].mxu0
        %v1132 = vadd.f32 %v830, %v1131
        %v1133 = vpop.f32.mrb[0].mxu0
        %1134 = vmatprep.mubr.f32.mxu0 0.0
        %v1135 = vand.u32 %v518, 4294901760
        %1136 = vmatmul.mubr.f32.gmra.mrb[0].mxu0 %v1135
        %v1137 = vpop.f32.mrb[0].mxu0
        %v1138 = vadd.f32 %v840, %v1137
        %v1139 = vpop.f32.mrb[0].mxu0
        %1140 = vmatprep.mubr.f32.mxu0 0.0
        %v1141 = vand.u32 %v521, 4294901760
        %1142 = vmatmul.mubr.f32.gmra.mrb[0].mxu0 %v1141
        %v1143 = vpop.f32.mrb[0].mxu0
        %v1144 = vadd.f32 %v850, %v1143
        %v1145 = vpop.f32.mrb[0].mxu0
        %1146 = vmatprep.mubr.f32.mxu0 0.0
        %v1147 = vand.u32 %v524, 4294901760
        %1148 = vmatmul.mubr.f32.gmra.mrb[0].mxu0 %v1147
        %v1149 = vpop.f32.mrb[0].mxu0
        %v1150 = vadd.f32 %v860, %v1149
        %v1151 = vpop.f32.mrb[0].mxu0
        %1152 = vmatprep.mubr.f32.mxu0 0.0
        %v1153 = vand.u32 %v527, 4294901760
        %1154 = vmatmul.mubr.f32.gmra.mrb[0].mxu0 %v1153
        %v1155 = vpop.f32.mrb[0].mxu0
        %v1156 = vadd.f32 %v870, %v1155
        %v1157 = vpop.f32.mrb[0].mxu0
        %1158 = vmatprep.mubr.f32.mxu0 0.0
        %v1159 = vand.u32 %v530, 4294901760
        %1160 = vmatmul.mubr.f32.gmra.mrb[0].mxu0 %v1159
        %v1161 = vpop.f32.mrb[0].mxu0
        %v1162 = vadd.f32 %v880, %v1161
        %v1163 = vpop.f32.mrb[0].mxu0
        %1164 = vmatprep.mubr.f32.mxu0 0.0
        %v1165 = vand.u32 %v533, 4294901760
        %1166 = vmatmul.mubr.f32.gmra.mrb[0].mxu0 %v1165
        %v1167 = vpop.f32.mrb[0].mxu0
        %v1168 = vadd.f32 %v890, %v1167
        %v1169 = vpop.f32.mrb[0].mxu0
        %1170 = vmatprep.mubr.f32.mxu0 0.0
        %v1171 = vand.u32 %v536, 4294901760
        %1172 = vmatmul.mubr.f32.gmra.mrb[0].mxu0 %v1171
        %v1173 = vpop.f32.mrb[0].mxu0
        %v1174 = vadd.f32 %v900, %v1173
        %v1175 = vpop.f32.mrb[0].mxu0
        %1176 = vmatprep.mubr.f32.mxu0 0.0
        %v1177 = vand.u32 %v539, 4294901760
        %1178 = vmatmul.mubr.f32.gmra.mrb[0].mxu0 %v1177
        %v1179 = vpop.f32.mrb[0].mxu0
        %v1180 = vadd.f32 %v910, %v1179
        %v1181 = vpop.f32.mrb[0].mxu0
        %1182 = vmatprep.mubr.f32.mxu0 0.0
        %v1183 = vand.u32 %v542, 4294901760
        %1184 = vmatmul.mubr.f32.gmra.mrb[0].mxu0 %v1183
        %v1185 = vpop.f32.mrb[0].mxu0
        %v1186 = vadd.f32 %v920, %v1185
        %v1187 = vpop.f32.mrb[0].mxu0
        %1188 = vmatprep.mubr.f32.mxu0 0.0
        %v1189 = vand.u32 %v545, 4294901760
        %1190 = vmatmul.mubr.f32.gmra.mrb[0].mxu0 %v1189
        %v1191 = vpop.f32.mrb[0].mxu0
        %v1192 = vadd.f32 %v930, %v1191
        %v1193 = vpop.f32.mrb[0].mxu0
        %1194 = vdwg.mxu0
        %1195 = vmatprep.subr.mxu0 0.0
        %v1196 = vand.u32 %v385, 4294901760
        %v1197 = vsub.f32 %v385, %v1196
        %1198 = vmatpush1.msra.mxu0 %v1197
        %1199 = vmatprep.subr.mxu0 0.0
        %1200 = vmatpush1.msra.mxu0 0.0
        %1201 = vmatprep.subr.mxu0 0.0
        %1202 = vmatpush1.msra.mxu0 0.0
        %1203 = vmatprep.subr.mxu0 0.0
        %1204 = vmatpush1.msra.mxu0 0.0
        %1205 = vmatprep.subr.mxu0 0.0
        %1206 = vmatpush1.msra.mxu0 0.0
        %1207 = vmatprep.subr.mxu0 0.0
        %1208 = vmatpush1.msra.mxu0 0.0
        %1209 = vmatprep.subr.mxu0 0.0
        %1210 = vmatpush1.msra.mxu0 0.0
        %1211 = vmatprep.subr.mxu0 0.0
        %1212 = vmatpush1.msra.mxu0 0.0
        %1213 = vmatprep.subr.mxu0 0.0
        %1214 = vmatpush1.msra.mxu0 0.0
        %1215 = vmatprep.subr.mxu0 0.0
        %1216 = vmatpush1.msra.mxu0 0.0
        %1217 = vmatprep.subr.mxu0 0.0
        %1218 = vmatpush1.msra.mxu0 0.0
        %1219 = vmatprep.subr.mxu0 0.0
        %1220 = vmatpush1.msra.mxu0 0.0
        %1221 = vmatprep.subr.mxu0 0.0
        %1222 = vmatpush1.msra.mxu0 0.0
        %1223 = vmatprep.subr.mxu0 0.0
        %1224 = vmatpush1.msra.mxu0 0.0
        %1225 = vmatprep.subr.mxu0 0.0
        %1226 = vmatpush1.msra.mxu0 0.0
        %1227 = vmatprep.subr.mxu0 0.0
        %1228 = vmatpush1.msra.mxu0 0.0
        %1229 = vmatprep.subr.mxu0 0.0
        %1230 = vmatpush1.msra.mxu0 0.0
        %1231 = vmatprep.subr.mxu0 0.0
        %1232 = vmatpush1.msra.mxu0 0.0
        %1233 = vmatprep.subr.mxu0 0.0
        %1234 = vmatpush1.msra.mxu0 0.0
        %1235 = vmatprep.subr.mxu0 0.0
        %1236 = vmatpush1.msra.mxu0 0.0
        %1237 = vmatprep.subr.mxu0 0.0
        %1238 = vmatpush1.msra.mxu0 0.0
        %1239 = vmatprep.subr.mxu0 0.0
        %1240 = vmatpush1.msra.mxu0 0.0
        %1241 = vmatprep.subr.mxu0 0.0
        %1242 = vmatpush1.msra.mxu0 0.0
        %1243 = vmatprep.subr.mxu0 0.0
        %1244 = vmatpush1.msra.mxu0 0.0
        %1245 = vmatprep.subr.mxu0 0.0
        %1246 = vmatpush1.msra.mxu0 0.0
        %1247 = vmatprep.subr.mxu0 0.0
        %1248 = vmatpush1.msra.mxu0 0.0
        %1249 = vmatprep.subr.mxu0 0.0
        %1250 = vmatpush1.msra.mxu0 0.0
        %1251 = vmatprep.subr.mxu0 0.0
        %1252 = vmatpush1.msra.mxu0 0.0
        %1253 = vmatprep.subr.mxu0 0.0
        %1254 = vmatpush1.msra.mxu0 0.0
        %1255 = vmatprep.subr.mxu0 0.0
        %1256 = vmatpush1.msra.mxu0 0.0
        %1257 = vmatprep.subr.mxu0 0.0
        %1258 = vmatpush1.msra.mxu0 0.0
        %1259 = vmatprep.subr.mxu0 0.0
        %1260 = vmatpush1.msra.mxu0 0.0
        %1261 = vmatprep.mubr.f32.mxu0 0.0
        %v1262 = vand.u32 %v452, 4294901760
        %v1263 = vsub.f32 %v452, %v1262
        %1264 = vmatmul.mubr.f32.gmra.mrb[0].mxu0 %v1263
        %v1265 = vpop.f32.mrb[0].mxu0
        %v1266 = vadd.f32 %v1006, %v1265
        %v1267 = vpop.f32.mrb[0].mxu0
        %1268 = vmatprep.mubr.f32.mxu0 0.0
        %v1269 = vand.u32 %v455, 4294901760
        %v1270 = vsub.f32 %v455, %v1269
        %1271 = vmatmul.mubr.f32.gmra.mrb[0].mxu0 %v1270
        %v1272 = vpop.f32.mrb[0].mxu0
        %v1273 = vadd.f32 %v1012, %v1272
        %v1274 = vpop.f32.mrb[0].mxu0
        %1275 = vmatprep.mubr.f32.mxu0 0.0
        %v1276 = vand.u32 %v458, 4294901760
        %v1277 = vsub.f32 %v458, %v1276
        %1278 = vmatmul.mubr.f32.gmra.mrb[0].mxu0 %v1277
        %v1279 = vpop.f32.mrb[0].mxu0
        %v1280 = vadd.f32 %v1018, %v1279
        %v1281 = vpop.f32.mrb[0].mxu0
        %1282 = vmatprep.mubr.f32.mxu0 0.0
        %v1283 = vand.u32 %v461, 4294901760
        %v1284 = vsub.f32 %v461, %v1283
        %1285 = vmatmul.mubr.f32.gmra.mrb[0].mxu0 %v1284
        %v1286 = vpop.f32.mrb[0].mxu0
        %v1287 = vadd.f32 %v1024, %v1286
        %v1288 = vpop.f32.mrb[0].mxu0
        %1289 = vmatprep.mubr.f32.mxu0 0.0
        %v1290 = vand.u32 %v464, 4294901760
        %v1291 = vsub.f32 %v464, %v1290
        %1292 = vmatmul.mubr.f32.gmra.mrb[0].mxu0 %v1291
        %v1293 = vpop.f32.mrb[0].mxu0
        %v1294 = vadd.f32 %v1030, %v1293
        %v1295 = vpop.f32.mrb[0].mxu0
        %1296 = vmatprep.mubr.f32.mxu0 0.0
        %v1297 = vand.u32 %v467, 4294901760
        %v1298 = vsub.f32 %v467, %v1297
        %1299 = vmatmul.mubr.f32.gmra.mrb[0].mxu0 %v1298
        %v1300 = vpop.f32.mrb[0].mxu0
        %v1301 = vadd.f32 %v1036, %v1300
        %v1302 = vpop.f32.mrb[0].mxu0
        %1303 = vmatprep.mubr.f32.mxu0 0.0
        %v1304 = vand.u32 %v470, 4294901760
        %v1305 = vsub.f32 %v470, %v1304
        %1306 = vmatmul.mubr.f32.gmra.mrb[0].mxu0 %v1305
        %v1307 = vpop.f32.mrb[0].mxu0
        %v1308 = vadd.f32 %v1042, %v1307
        %v1309 = vpop.f32.mrb[0].mxu0
        %1310 = vmatprep.mubr.f32.mxu0 0.0
        %v1311 = vand.u32 %v473, 4294901760
        %v1312 = vsub.f32 %v473, %v1311
        %1313 = vmatmul.mubr.f32.gmra.mrb[0].mxu0 %v1312
        %v1314 = vpop.f32.mrb[0].mxu0
        %v1315 = vadd.f32 %v1048, %v1314
        %v1316 = vpop.f32.mrb[0].mxu0
        %1317 = vmatprep.mubr.f32.mxu0 0.0
        %v1318 = vand.u32 %v476, 4294901760
        %v1319 = vsub.f32 %v476, %v1318
        %1320 = vmatmul.mubr.f32.gmra.mrb[0].mxu0 %v1319
        %v1321 = vpop.f32.mrb[0].mxu0
        %v1322 = vadd.f32 %v1054, %v1321
        %v1323 = vpop.f32.mrb[0].mxu0
        %1324 = vmatprep.mubr.f32.mxu0 0.0
        %v1325 = vand.u32 %v479, 4294901760
        %v1326 = vsub.f32 %v479, %v1325
        %1327 = vmatmul.mubr.f32.gmra.mrb[0].mxu0 %v1326
        %v1328 = vpop.f32.mrb[0].mxu0
        %v1329 = vadd.f32 %v1060, %v1328
        %v1330 = vpop.f32.mrb[0].mxu0
        %1331 = vmatprep.mubr.f32.mxu0 0.0
        %v1332 = vand.u32 %v482, 4294901760
        %v1333 = vsub.f32 %v482, %v1332
        %1334 = vmatmul.mubr.f32.gmra.mrb[0].mxu0 %v1333
        %v1335 = vpop.f32.mrb[0].mxu0
        %v1336 = vadd.f32 %v1066, %v1335
        %v1337 = vpop.f32.mrb[0].mxu0
        %1338 = vmatprep.mubr.f32.mxu0 0.0
        %v1339 = vand.u32 %v485, 4294901760
        %v1340 = vsub.f32 %v485, %v1339
        %1341 = vmatmul.mubr.f32.gmra.mrb[0].mxu0 %v1340
        %v1342 = vpop.f32.mrb[0].mxu0
        %v1343 = vadd.f32 %v1072, %v1342
        %v1344 = vpop.f32.mrb[0].mxu0
        %1345 = vmatprep.mubr.f32.mxu0 0.0
        %v1346 = vand.u32 %v488, 4294901760
        %v1347 = vsub.f32 %v488, %v1346
        %1348 = vmatmul.mubr.f32.gmra.mrb[0].mxu0 %v1347
        %v1349 = vpop.f32.mrb[0].mxu0
        %v1350 = vadd.f32 %v1078, %v1349
        %v1351 = vpop.f32.mrb[0].mxu0
        %1352 = vmatprep.mubr.f32.mxu0 0.0
        %v1353 = vand.u32 %v491, 4294901760
        %v1354 = vsub.f32 %v491, %v1353
        %1355 = vmatmul.mubr.f32.gmra.mrb[0].mxu0 %v1354
        %v1356 = vpop.f32.mrb[0].mxu0
        %v1357 = vadd.f32 %v1084, %v1356
        %v1358 = vpop.f32.mrb[0].mxu0
        %1359 = vmatprep.mubr.f32.mxu0 0.0
        %v1360 = vand.u32 %v494, 4294901760
        %v1361 = vsub.f32 %v494, %v1360
        %1362 = vmatmul.mubr.f32.gmra.mrb[0].mxu0 %v1361
        %v1363 = vpop.f32.mrb[0].mxu0
        %v1364 = vadd.f32 %v1090, %v1363
        %v1365 = vpop.f32.mrb[0].mxu0
        %1366 = vmatprep.mubr.f32.mxu0 0.0
        %v1367 = vand.u32 %v497, 4294901760
        %v1368 = vsub.f32 %v497, %v1367
        %1369 = vmatmul.mubr.f32.gmra.mrb[0].mxu0 %v1368
        %v1370 = vpop.f32.mrb[0].mxu0
        %v1371 = vadd.f32 %v1096, %v1370
        %v1372 = vpop.f32.mrb[0].mxu0
        %1373 = vmatprep.mubr.f32.mxu0 0.0
        %v1374 = vand.u32 %v500, 4294901760
        %v1375 = vsub.f32 %v500, %v1374
        %1376 = vmatmul.mubr.f32.gmra.mrb[0].mxu0 %v1375
        %v1377 = vpop.f32.mrb[0].mxu0
        %v1378 = vadd.f32 %v1102, %v1377
        %v1379 = vpop.f32.mrb[0].mxu0
        %1380 = vmatprep.mubr.f32.mxu0 0.0
        %v1381 = vand.u32 %v503, 4294901760
        %v1382 = vsub.f32 %v503, %v1381
        %1383 = vmatmul.mubr.f32.gmra.mrb[0].mxu0 %v1382
        %v1384 = vpop.f32.mrb[0].mxu0
        %v1385 = vadd.f32 %v1108, %v1384
        %v1386 = vpop.f32.mrb[0].mxu0
        %1387 = vmatprep.mubr.f32.mxu0 0.0
        %v1388 = vand.u32 %v506, 4294901760
        %v1389 = vsub.f32 %v506, %v1388
        %1390 = vmatmul.mubr.f32.gmra.mrb[0].mxu0 %v1389
        %v1391 = vpop.f32.mrb[0].mxu0
        %v1392 = vadd.f32 %v1114, %v1391
        %v1393 = vpop.f32.mrb[0].mxu0
        %1394 = vmatprep.mubr.f32.mxu0 0.0
        %v1395 = vand.u32 %v509, 4294901760
        %v1396 = vsub.f32 %v509, %v1395
        %1397 = vmatmul.mubr.f32.gmra.mrb[0].mxu0 %v1396
        %v1398 = vpop.f32.mrb[0].mxu0
        %v1399 = vadd.f32 %v1120, %v1398
        %v1400 = vpop.f32.mrb[0].mxu0
        %1401 = vmatprep.mubr.f32.mxu0 0.0
        %v1402 = vand.u32 %v512, 4294901760
        %v1403 = vsub.f32 %v512, %v1402
        %1404 = vmatmul.mubr.f32.gmra.mrb[0].mxu0 %v1403
        %v1405 = vpop.f32.mrb[0].mxu0
        %v1406 = vadd.f32 %v1126, %v1405
        %v1407 = vpop.f32.mrb[0].mxu0
        %1408 = vmatprep.mubr.f32.mxu0 0.0
        %v1409 = vand.u32 %v515, 4294901760
        %v1410 = vsub.f32 %v515, %v1409
        %1411 = vmatmul.mubr.f32.gmra.mrb[0].mxu0 %v1410
        %v1412 = vpop.f32.mrb[0].mxu0
        %v1413 = vadd.f32 %v1132, %v1412
        %v1414 = vpop.f32.mrb[0].mxu0
        %1415 = vmatprep.mubr.f32.mxu0 0.0
        %v1416 = vand.u32 %v518, 4294901760
        %v1417 = vsub.f32 %v518, %v1416
        %1418 = vmatmul.mubr.f32.gmra.mrb[0].mxu0 %v1417
        %v1419 = vpop.f32.mrb[0].mxu0
        %v1420 = vadd.f32 %v1138, %v1419
        %v1421 = vpop.f32.mrb[0].mxu0
        %1422 = vmatprep.mubr.f32.mxu0 0.0
        %v1423 = vand.u32 %v521, 4294901760
        %v1424 = vsub.f32 %v521, %v1423
        %1425 = vmatmul.mubr.f32.gmra.mrb[0].mxu0 %v1424
        %v1426 = vpop.f32.mrb[0].mxu0
        %v1427 = vadd.f32 %v1144, %v1426
        %v1428 = vpop.f32.mrb[0].mxu0
        %1429 = vmatprep.mubr.f32.mxu0 0.0
        %v1430 = vand.u32 %v524, 4294901760
        %v1431 = vsub.f32 %v524, %v1430
        %1432 = vmatmul.mubr.f32.gmra.mrb[0].mxu0 %v1431
        %v1433 = vpop.f32.mrb[0].mxu0
        %v1434 = vadd.f32 %v1150, %v1433
        %v1435 = vpop.f32.mrb[0].mxu0
        %1436 = vmatprep.mubr.f32.mxu0 0.0
        %v1437 = vand.u32 %v527, 4294901760
        %v1438 = vsub.f32 %v527, %v1437
        %1439 = vmatmul.mubr.f32.gmra.mrb[0].mxu0 %v1438
        %v1440 = vpop.f32.mrb[0].mxu0
        %v1441 = vadd.f32 %v1156, %v1440
        %v1442 = vpop.f32.mrb[0].mxu0
        %1443 = vmatprep.mubr.f32.mxu0 0.0
        %v1444 = vand.u32 %v530, 4294901760
        %v1445 = vsub.f32 %v530, %v1444
        %1446 = vmatmul.mubr.f32.gmra.mrb[0].mxu0 %v1445
        %v1447 = vpop.f32.mrb[0].mxu0
        %v1448 = vadd.f32 %v1162, %v1447
        %v1449 = vpop.f32.mrb[0].mxu0
        %1450 = vmatprep.mubr.f32.mxu0 0.0
        %v1451 = vand.u32 %v533, 4294901760
        %v1452 = vsub.f32 %v533, %v1451
        %1453 = vmatmul.mubr.f32.gmra.mrb[0].mxu0 %v1452
        %v1454 = vpop.f32.mrb[0].mxu0
        %v1455 = vadd.f32 %v1168, %v1454
        %v1456 = vpop.f32.mrb[0].mxu0
        %1457 = vmatprep.mubr.f32.mxu0 0.0
        %v1458 = vand.u32 %v536, 4294901760
        %v1459 = vsub.f32 %v536, %v1458
        %1460 = vmatmul.mubr.f32.gmra.mrb[0].mxu0 %v1459
        %v1461 = vpop.f32.mrb[0].mxu0
        %v1462 = vadd.f32 %v1174, %v1461
        %v1463 = vpop.f32.mrb[0].mxu0
        %1464 = vmatprep.mubr.f32.mxu0 0.0
        %v1465 = vand.u32 %v539, 4294901760
        %v1466 = vsub.f32 %v539, %v1465
        %1467 = vmatmul.mubr.f32.gmra.mrb[0].mxu0 %v1466
        %v1468 = vpop.f32.mrb[0].mxu0
        %v1469 = vadd.f32 %v1180, %v1468
        %v1470 = vpop.f32.mrb[0].mxu0
        %1471 = vmatprep.mubr.f32.mxu0 0.0
        %v1472 = vand.u32 %v542, 4294901760
        %v1473 = vsub.f32 %v542, %v1472
        %1474 = vmatmul.mubr.f32.gmra.mrb[0].mxu0 %v1473
        %v1475 = vpop.f32.mrb[0].mxu0
        %v1476 = vadd.f32 %v1186, %v1475
        %v1477 = vpop.f32.mrb[0].mxu0
        %1478 = vmatprep.mubr.f32.mxu0 0.0
        %v1479 = vand.u32 %v545, 4294901760
        %v1480 = vsub.f32 %v545, %v1479
        %1481 = vmatmul.mubr.f32.gmra.mrb[0].mxu0 %v1480
        %v1482 = vpop.f32.mrb[0].mxu0
        %v1483 = vadd.f32 %v1192, %v1482
        %v1484 = vpop.f32.mrb[0].mxu0
        %1485 = vdwg.mxu0
        %1486 = vmatprep.subr.mxu0 0.0
        %v1487 = vand.u32 %v385, 4294901760
        %1488 = vmatpush1.msra.mxu0 %v1487
        %1489 = vmatprep.subr.mxu0 0.0
        %1490 = vmatpush1.msra.mxu0 0.0
        %1491 = vmatprep.subr.mxu0 0.0
        %1492 = vmatpush1.msra.mxu0 0.0
        %1493 = vmatprep.subr.mxu0 0.0
        %1494 = vmatpush1.msra.mxu0 0.0
        %1495 = vmatprep.subr.mxu0 0.0
        %1496 = vmatpush1.msra.mxu0 0.0
        %1497 = vmatprep.subr.mxu0 0.0
        %1498 = vmatpush1.msra.mxu0 0.0
        %1499 = vmatprep.subr.mxu0 0.0
        %1500 = vmatpush1.msra.mxu0 0.0
        %1501 = vmatprep.subr.mxu0 0.0
        %1502 = vmatpush1.msra.mxu0 0.0
        %1503 = vmatprep.subr.mxu0 0.0
        %1504 = vmatpush1.msra.mxu0 0.0
        %1505 = vmatprep.subr.mxu0 0.0
        %1506 = vmatpush1.msra.mxu0 0.0
        %1507 = vmatprep.subr.mxu0 0.0
        %1508 = vmatpush1.msra.mxu0 0.0
        %1509 = vmatprep.subr.mxu0 0.0
        %1510 = vmatpush1.msra.mxu0 0.0
        %1511 = vmatprep.subr.mxu0 0.0
        %1512 = vmatpush1.msra.mxu0 0.0
        %1513 = vmatprep.subr.mxu0 0.0
        %1514 = vmatpush1.msra.mxu0 0.0
        %1515 = vmatprep.subr.mxu0 0.0
        %1516 = vmatpush1.msra.mxu0 0.0
        %1517 = vmatprep.subr.mxu0 0.0
        %1518 = vmatpush1.msra.mxu0 0.0
        %1519 = vmatprep.subr.mxu0 0.0
        %1520 = vmatpush1.msra.mxu0 0.0
        %1521 = vmatprep.subr.mxu0 0.0
        %1522 = vmatpush1.msra.mxu0 0.0
        %1523 = vmatprep.subr.mxu0 0.0
        %1524 = vmatpush1.msra.mxu0 0.0
        %1525 = vmatprep.subr.mxu0 0.0
        %1526 = vmatpush1.msra.mxu0 0.0
        %1527 = vmatprep.subr.mxu0 0.0
        %1528 = vmatpush1.msra.mxu0 0.0
        %1529 = vmatprep.subr.mxu0 0.0
        %1530 = vmatpush1.msra.mxu0 0.0
        %1531 = vmatprep.subr.mxu0 0.0
        %1532 = vmatpush1.msra.mxu0 0.0
        %1533 = vmatprep.subr.mxu0 0.0
        %1534 = vmatpush1.msra.mxu0 0.0
        %1535 = vmatprep.subr.mxu0 0.0
        %1536 = vmatpush1.msra.mxu0 0.0
        %1537 = vmatprep.subr.mxu0 0.0
        %1538 = vmatpush1.msra.mxu0 0.0
        %1539 = vmatprep.subr.mxu0 0.0
        %1540 = vmatpush1.msra.mxu0 0.0
        %1541 = vmatprep.subr.mxu0 0.0
        %1542 = vmatpush1.msra.mxu0 0.0
        %1543 = vmatprep.subr.mxu0 0.0
        %1544 = vmatpush1.msra.mxu0 0.0
        %1545 = vmatprep.subr.mxu0 0.0
        %1546 = vmatpush1.msra.mxu0 0.0
        %1547 = vmatprep.subr.mxu0 0.0
        %1548 = vmatpush1.msra.mxu0 0.0
        %1549 = vmatprep.subr.mxu0 0.0
        %1550 = vmatpush1.msra.mxu0 0.0
        %1551 = vmatprep.mubr.f32.mxu0 0.0
        %v1552 = vand.u32 %v452, 4294901760
        %v1553 = vsub.f32 %v452, %v1552
        %v1554 = vand.u32 %v1553, 4294901760
        %1555 = vmatmul.mubr.f32.gmra.mrb[0].mxu0 %v1554
        %v1556 = vpop.f32.mrb[0].mxu0
        %v1557 = vadd.f32 %v1266, %v1556
        %v1558 = vpop.f32.mrb[0].mxu0
        %1559 = vmatprep.mubr.f32.mxu0 0.0
        %v1560 = vand.u32 %v455, 4294901760
        %v1561 = vsub.f32 %v455, %v1560
        %v1562 = vand.u32 %v1561, 4294901760
        %1563 = vmatmul.mubr.f32.gmra.mrb[0].mxu0 %v1562
        %v1564 = vpop.f32.mrb[0].mxu0
        %v1565 = vadd.f32 %v1273, %v1564
        %v1566 = vpop.f32.mrb[0].mxu0
        %1567 = vmatprep.mubr.f32.mxu0 0.0
        %v1568 = vand.u32 %v458, 4294901760
        %v1569 = vsub.f32 %v458, %v1568
        %v1570 = vand.u32 %v1569, 4294901760
        %1571 = vmatmul.mubr.f32.gmra.mrb[0].mxu0 %v1570
        %v1572 = vpop.f32.mrb[0].mxu0
        %v1573 = vadd.f32 %v1280, %v1572
        %v1574 = vpop.f32.mrb[0].mxu0
        %1575 = vmatprep.mubr.f32.mxu0 0.0
        %v1576 = vand.u32 %v461, 4294901760
        %v1577 = vsub.f32 %v461, %v1576
        %v1578 = vand.u32 %v1577, 4294901760
        %1579 = vmatmul.mubr.f32.gmra.mrb[0].mxu0 %v1578
        %v1580 = vpop.f32.mrb[0].mxu0
        %v1581 = vadd.f32 %v1287, %v1580
        %v1582 = vpop.f32.mrb[0].mxu0
        %1583 = vmatprep.mubr.f32.mxu0 0.0
        %v1584 = vand.u32 %v464, 4294901760
        %v1585 = vsub.f32 %v464, %v1584
        %v1586 = vand.u32 %v1585, 4294901760
        %1587 = vmatmul.mubr.f32.gmra.mrb[0].mxu0 %v1586
        %v1588 = vpop.f32.mrb[0].mxu0
        %v1589 = vadd.f32 %v1294, %v1588
        %v1590 = vpop.f32.mrb[0].mxu0
        %1591 = vmatprep.mubr.f32.mxu0 0.0
        %v1592 = vand.u32 %v467, 4294901760
        %v1593 = vsub.f32 %v467, %v1592
        %v1594 = vand.u32 %v1593, 4294901760
        %1595 = vmatmul.mubr.f32.gmra.mrb[0].mxu0 %v1594
        %v1596 = vpop.f32.mrb[0].mxu0
        %v1597 = vadd.f32 %v1301, %v1596
        %v1598 = vpop.f32.mrb[0].mxu0
        %1599 = vmatprep.mubr.f32.mxu0 0.0
        %v1600 = vand.u32 %v470, 4294901760
        %v1601 = vsub.f32 %v470, %v1600
        %v1602 = vand.u32 %v1601, 4294901760
        %1603 = vmatmul.mubr.f32.gmra.mrb[0].mxu0 %v1602
        %v1604 = vpop.f32.mrb[0].mxu0
        %v1605 = vadd.f32 %v1308, %v1604
        %v1606 = vpop.f32.mrb[0].mxu0
        %1607 = vmatprep.mubr.f32.mxu0 0.0
        %v1608 = vand.u32 %v473, 4294901760
        %v1609 = vsub.f32 %v473, %v1608
        %v1610 = vand.u32 %v1609, 4294901760
        %1611 = vmatmul.mubr.f32.gmra.mrb[0].mxu0 %v1610
        %v1612 = vpop.f32.mrb[0].mxu0
        %v1613 = vadd.f32 %v1315, %v1612
        %v1614 = vpop.f32.mrb[0].mxu0
        %1615 = vmatprep.mubr.f32.mxu0 0.0
        %v1616 = vand.u32 %v476, 4294901760
        %v1617 = vsub.f32 %v476, %v1616
        %v1618 = vand.u32 %v1617, 4294901760
        %1619 = vmatmul.mubr.f32.gmra.mrb[0].mxu0 %v1618
        %v1620 = vpop.f32.mrb[0].mxu0
        %v1621 = vadd.f32 %v1322, %v1620
        %v1622 = vpop.f32.mrb[0].mxu0
        %1623 = vmatprep.mubr.f32.mxu0 0.0
        %v1624 = vand.u32 %v479, 4294901760
        %v1625 = vsub.f32 %v479, %v1624
        %v1626 = vand.u32 %v1625, 4294901760
        %1627 = vmatmul.mubr.f32.gmra.mrb[0].mxu0 %v1626
        %v1628 = vpop.f32.mrb[0].mxu0
        %v1629 = vadd.f32 %v1329, %v1628
        %v1630 = vpop.f32.mrb[0].mxu0
        %1631 = vmatprep.mubr.f32.mxu0 0.0
        %v1632 = vand.u32 %v482, 4294901760
        %v1633 = vsub.f32 %v482, %v1632
        %v1634 = vand.u32 %v1633, 4294901760
        %1635 = vmatmul.mubr.f32.gmra.mrb[0].mxu0 %v1634
        %v1636 = vpop.f32.mrb[0].mxu0
        %v1637 = vadd.f32 %v1336, %v1636
        %v1638 = vpop.f32.mrb[0].mxu0
        %1639 = vmatprep.mubr.f32.mxu0 0.0
        %v1640 = vand.u32 %v485, 4294901760
        %v1641 = vsub.f32 %v485, %v1640
        %v1642 = vand.u32 %v1641, 4294901760
        %1643 = vmatmul.mubr.f32.gmra.mrb[0].mxu0 %v1642
        %v1644 = vpop.f32.mrb[0].mxu0
        %v1645 = vadd.f32 %v1343, %v1644
        %v1646 = vpop.f32.mrb[0].mxu0
        %1647 = vmatprep.mubr.f32.mxu0 0.0
        %v1648 = vand.u32 %v488, 4294901760
        %v1649 = vsub.f32 %v488, %v1648
        %v1650 = vand.u32 %v1649, 4294901760
        %1651 = vmatmul.mubr.f32.gmra.mrb[0].mxu0 %v1650
        %v1652 = vpop.f32.mrb[0].mxu0
        %v1653 = vadd.f32 %v1350, %v1652
        %v1654 = vpop.f32.mrb[0].mxu0
        %1655 = vmatprep.mubr.f32.mxu0 0.0
        %v1656 = vand.u32 %v491, 4294901760
        %v1657 = vsub.f32 %v491, %v1656
        %v1658 = vand.u32 %v1657, 4294901760
        %1659 = vmatmul.mubr.f32.gmra.mrb[0].mxu0 %v1658
        %v1660 = vpop.f32.mrb[0].mxu0
        %v1661 = vadd.f32 %v1357, %v1660
        %v1662 = vpop.f32.mrb[0].mxu0
        %1663 = vmatprep.mubr.f32.mxu0 0.0
        %v1664 = vand.u32 %v494, 4294901760
        %v1665 = vsub.f32 %v494, %v1664
        %v1666 = vand.u32 %v1665, 4294901760
        %1667 = vmatmul.mubr.f32.gmra.mrb[0].mxu0 %v1666
        %v1668 = vpop.f32.mrb[0].mxu0
        %v1669 = vadd.f32 %v1364, %v1668
        %v1670 = vpop.f32.mrb[0].mxu0
        %1671 = vmatprep.mubr.f32.mxu0 0.0
        %v1672 = vand.u32 %v497, 4294901760
        %v1673 = vsub.f32 %v497, %v1672
        %v1674 = vand.u32 %v1673, 4294901760
        %1675 = vmatmul.mubr.f32.gmra.mrb[0].mxu0 %v1674
        %v1676 = vpop.f32.mrb[0].mxu0
        %v1677 = vadd.f32 %v1371, %v1676
        %v1678 = vpop.f32.mrb[0].mxu0
        %1679 = vmatprep.mubr.f32.mxu0 0.0
        %v1680 = vand.u32 %v500, 4294901760
        %v1681 = vsub.f32 %v500, %v1680
        %v1682 = vand.u32 %v1681, 4294901760
        %1683 = vmatmul.mubr.f32.gmra.mrb[0].mxu0 %v1682
        %v1684 = vpop.f32.mrb[0].mxu0
        %v1685 = vadd.f32 %v1378, %v1684
        %v1686 = vpop.f32.mrb[0].mxu0
        %1687 = vmatprep.mubr.f32.mxu0 0.0
        %v1688 = vand.u32 %v503, 4294901760
        %v1689 = vsub.f32 %v503, %v1688
        %v1690 = vand.u32 %v1689, 4294901760
        %1691 = vmatmul.mubr.f32.gmra.mrb[0].mxu0 %v1690
        %v1692 = vpop.f32.mrb[0].mxu0
        %v1693 = vadd.f32 %v1385, %v1692
        %v1694 = vpop.f32.mrb[0].mxu0
        %1695 = vmatprep.mubr.f32.mxu0 0.0
        %v1696 = vand.u32 %v506, 4294901760
        %v1697 = vsub.f32 %v506, %v1696
        %v1698 = vand.u32 %v1697, 4294901760
        %1699 = vmatmul.mubr.f32.gmra.mrb[0].mxu0 %v1698
        %v1700 = vpop.f32.mrb[0].mxu0
        %v1701 = vadd.f32 %v1392, %v1700
        %v1702 = vpop.f32.mrb[0].mxu0
        %1703 = vmatprep.mubr.f32.mxu0 0.0
        %v1704 = vand.u32 %v509, 4294901760
        %v1705 = vsub.f32 %v509, %v1704
        %v1706 = vand.u32 %v1705, 4294901760
        %1707 = vmatmul.mubr.f32.gmra.mrb[0].mxu0 %v1706
        %v1708 = vpop.f32.mrb[0].mxu0
        %v1709 = vadd.f32 %v1399, %v1708
        %v1710 = vpop.f32.mrb[0].mxu0
        %1711 = vmatprep.mubr.f32.mxu0 0.0
        %v1712 = vand.u32 %v512, 4294901760
        %v1713 = vsub.f32 %v512, %v1712
        %v1714 = vand.u32 %v1713, 4294901760
        %1715 = vmatmul.mubr.f32.gmra.mrb[0].mxu0 %v1714
        %v1716 = vpop.f32.mrb[0].mxu0
        %v1717 = vadd.f32 %v1406, %v1716
        %v1718 = vpop.f32.mrb[0].mxu0
        %1719 = vmatprep.mubr.f32.mxu0 0.0
        %v1720 = vand.u32 %v515, 4294901760
        %v1721 = vsub.f32 %v515, %v1720
        %v1722 = vand.u32 %v1721, 4294901760
        %1723 = vmatmul.mubr.f32.gmra.mrb[0].mxu0 %v1722
        %v1724 = vpop.f32.mrb[0].mxu0
        %v1725 = vadd.f32 %v1413, %v1724
        %v1726 = vpop.f32.mrb[0].mxu0
        %1727 = vmatprep.mubr.f32.mxu0 0.0
        %v1728 = vand.u32 %v518, 4294901760
        %v1729 = vsub.f32 %v518, %v1728
        %v1730 = vand.u32 %v1729, 4294901760
        %1731 = vmatmul.mubr.f32.gmra.mrb[0].mxu0 %v1730
        %v1732 = vpop.f32.mrb[0].mxu0
        %v1733 = vadd.f32 %v1420, %v1732
        %v1734 = vpop.f32.mrb[0].mxu0
        %1735 = vmatprep.mubr.f32.mxu0 0.0
        %v1736 = vand.u32 %v521, 4294901760
        %v1737 = vsub.f32 %v521, %v1736
        %v1738 = vand.u32 %v1737, 4294901760
        %1739 = vmatmul.mubr.f32.gmra.mrb[0].mxu0 %v1738
        %v1740 = vpop.f32.mrb[0].mxu0
        %v1741 = vadd.f32 %v1427, %v1740
        %v1742 = vpop.f32.mrb[0].mxu0
        %1743 = vmatprep.mubr.f32.mxu0 0.0
        %v1744 = vand.u32 %v524, 4294901760
        %v1745 = vsub.f32 %v524, %v1744
        %v1746 = vand.u32 %v1745, 4294901760
        %1747 = vmatmul.mubr.f32.gmra.mrb[0].mxu0 %v1746
        %v1748 = vpop.f32.mrb[0].mxu0
        %v1749 = vadd.f32 %v1434, %v1748
        %v1750 = vpop.f32.mrb[0].mxu0
        %1751 = vmatprep.mubr.f32.mxu0 0.0
        %v1752 = vand.u32 %v527, 4294901760
        %v1753 = vsub.f32 %v527, %v1752
        %v1754 = vand.u32 %v1753, 4294901760
        %1755 = vmatmul.mubr.f32.gmra.mrb[0].mxu0 %v1754
        %v1756 = vpop.f32.mrb[0].mxu0
        %v1757 = vadd.f32 %v1441, %v1756
        %v1758 = vpop.f32.mrb[0].mxu0
        %1759 = vmatprep.mubr.f32.mxu0 0.0
        %v1760 = vand.u32 %v530, 4294901760
        %v1761 = vsub.f32 %v530, %v1760
        %v1762 = vand.u32 %v1761, 4294901760
        %1763 = vmatmul.mubr.f32.gmra.mrb[0].mxu0 %v1762
        %v1764 = vpop.f32.mrb[0].mxu0
        %v1765 = vadd.f32 %v1448, %v1764
        %v1766 = vpop.f32.mrb[0].mxu0
        %1767 = vmatprep.mubr.f32.mxu0 0.0
        %v1768 = vand.u32 %v533, 4294901760
        %v1769 = vsub.f32 %v533, %v1768
        %v1770 = vand.u32 %v1769, 4294901760
        %1771 = vmatmul.mubr.f32.gmra.mrb[0].mxu0 %v1770
        %v1772 = vpop.f32.mrb[0].mxu0
        %v1773 = vadd.f32 %v1455, %v1772
        %v1774 = vpop.f32.mrb[0].mxu0
        %1775 = vmatprep.mubr.f32.mxu0 0.0
        %v1776 = vand.u32 %v536, 4294901760
        %v1777 = vsub.f32 %v536, %v1776
        %v1778 = vand.u32 %v1777, 4294901760
        %1779 = vmatmul.mubr.f32.gmra.mrb[0].mxu0 %v1778
        %v1780 = vpop.f32.mrb[0].mxu0
        %v1781 = vadd.f32 %v1462, %v1780
        %v1782 = vpop.f32.mrb[0].mxu0
        %1783 = vmatprep.mubr.f32.mxu0 0.0
        %v1784 = vand.u32 %v539, 4294901760
        %v1785 = vsub.f32 %v539, %v1784
        %v1786 = vand.u32 %v1785, 4294901760
        %1787 = vmatmul.mubr.f32.gmra.mrb[0].mxu0 %v1786
        %v1788 = vpop.f32.mrb[0].mxu0
        %v1789 = vadd.f32 %v1469, %v1788
        %v1790 = vpop.f32.mrb[0].mxu0
        %1791 = vmatprep.mubr.f32.mxu0 0.0
        %v1792 = vand.u32 %v542, 4294901760
        %v1793 = vsub.f32 %v542, %v1792
        %v1794 = vand.u32 %v1793, 4294901760
        %1795 = vmatmul.mubr.f32.gmra.mrb[0].mxu0 %v1794
        %v1796 = vpop.f32.mrb[0].mxu0
        %v1797 = vadd.f32 %v1476, %v1796
        %v1798 = vpop.f32.mrb[0].mxu0
        %1799 = vmatprep.mubr.f32.mxu0 0.0
        %v1800 = vand.u32 %v545, 4294901760
        %v1801 = vsub.f32 %v545, %v1800
        %v1802 = vand.u32 %v1801, 4294901760
        %1803 = vmatmul.mubr.f32.gmra.mrb[0].mxu0 %v1802
        %v1804 = vpop.f32.mrb[0].mxu0
        %v1805 = vadd.f32 %v1483, %v1804
        %v1806 = vpop.f32.mrb[0].mxu0
        %1807 = vdwg.mxu0
        %1808 = vmatprep.subr.mxu0 0.0
        %v1809 = vand.u32 %v385, 4294901760
        %v1810 = vsub.f32 %v385, %v1809
        %v1811 = vand.u32 %v1810, 4294901760
        %1812 = vmatpush1.msra.mxu0 %v1811
        %1813 = vmatprep.subr.mxu0 0.0
        %1814 = vmatpush1.msra.mxu0 0.0
        %1815 = vmatprep.subr.mxu0 0.0
        %1816 = vmatpush1.msra.mxu0 0.0
        %1817 = vmatprep.subr.mxu0 0.0
        %1818 = vmatpush1.msra.mxu0 0.0
        %1819 = vmatprep.subr.mxu0 0.0
        %1820 = vmatpush1.msra.mxu0 0.0
        %1821 = vmatprep.subr.mxu0 0.0
        %1822 = vmatpush1.msra.mxu0 0.0
        %1823 = vmatprep.subr.mxu0 0.0
        %1824 = vmatpush1.msra.mxu0 0.0
        %1825 = vmatprep.subr.mxu0 0.0
        %1826 = vmatpush1.msra.mxu0 0.0
        %1827 = vmatprep.subr.mxu0 0.0
        %1828 = vmatpush1.msra.mxu0 0.0
        %1829 = vmatprep.subr.mxu0 0.0
        %1830 = vmatpush1.msra.mxu0 0.0
        %1831 = vmatprep.subr.mxu0 0.0
        %1832 = vmatpush1.msra.mxu0 0.0
        %1833 = vmatprep.subr.mxu0 0.0
        %1834 = vmatpush1.msra.mxu0 0.0
        %1835 = vmatprep.subr.mxu0 0.0
        %1836 = vmatpush1.msra.mxu0 0.0
        %1837 = vmatprep.subr.mxu0 0.0
        %1838 = vmatpush1.msra.mxu0 0.0
        %1839 = vmatprep.subr.mxu0 0.0
        %1840 = vmatpush1.msra.mxu0 0.0
        %1841 = vmatprep.subr.mxu0 0.0
        %1842 = vmatpush1.msra.mxu0 0.0
        %1843 = vmatprep.subr.mxu0 0.0
        %1844 = vmatpush1.msra.mxu0 0.0
        %1845 = vmatprep.subr.mxu0 0.0
        %1846 = vmatpush1.msra.mxu0 0.0
        %1847 = vmatprep.subr.mxu0 0.0
        %1848 = vmatpush1.msra.mxu0 0.0
        %1849 = vmatprep.subr.mxu0 0.0
        %1850 = vmatpush1.msra.mxu0 0.0
        %1851 = vmatprep.subr.mxu0 0.0
        %1852 = vmatpush1.msra.mxu0 0.0
        %1853 = vmatprep.subr.mxu0 0.0
        %1854 = vmatpush1.msra.mxu0 0.0
        %1855 = vmatprep.subr.mxu0 0.0
        %1856 = vmatpush1.msra.mxu0 0.0
        %1857 = vmatprep.subr.mxu0 0.0
        %1858 = vmatpush1.msra.mxu0 0.0
        %1859 = vmatprep.subr.mxu0 0.0
        %1860 = vmatpush1.msra.mxu0 0.0
        %1861 = vmatprep.subr.mxu0 0.0
        %1862 = vmatpush1.msra.mxu0 0.0
        %1863 = vmatprep.subr.mxu0 0.0
        %1864 = vmatpush1.msra.mxu0 0.0
        %1865 = vmatprep.subr.mxu0 0.0
        %1866 = vmatpush1.msra.mxu0 0.0
        %1867 = vmatprep.subr.mxu0 0.0
        %1868 = vmatpush1.msra.mxu0 0.0
        %1869 = vmatprep.subr.mxu0 0.0
        %1870 = vmatpush1.msra.mxu0 0.0
        %1871 = vmatprep.subr.mxu0 0.0
        %1872 = vmatpush1.msra.mxu0 0.0
        %1873 = vmatprep.subr.mxu0 0.0
        %1874 = vmatpush1.msra.mxu0 0.0
        %1875 = vmatprep.mubr.f32.mxu0 0.0
        %v1876 = vand.u32 %v452, 4294901760
        %1877 = vmatmul.mubr.f32.gmra.mrb[0].mxu0 %v1876
        %v1878 = vpop.f32.mrb[0].mxu0
        %v1879 = vadd.f32 %v1557, %v1878
        %v1880 = vpop.f32.mrb[0].mxu0
        %1881 = vmatprep.mubr.f32.mxu0 0.0
        %v1882 = vand.u32 %v455, 4294901760
        %1883 = vmatmul.mubr.f32.gmra.mrb[0].mxu0 %v1882
        %v1884 = vpop.f32.mrb[0].mxu0
        %v1885 = vadd.f32 %v1565, %v1884
        %v1886 = vpop.f32.mrb[0].mxu0
        %1887 = vmatprep.mubr.f32.mxu0 0.0
        %v1888 = vand.u32 %v458, 4294901760
        %1889 = vmatmul.mubr.f32.gmra.mrb[0].mxu0 %v1888
        %v1890 = vpop.f32.mrb[0].mxu0
        %v1891 = vadd.f32 %v1573, %v1890
        %v1892 = vpop.f32.mrb[0].mxu0
        %1893 = vmatprep.mubr.f32.mxu0 0.0
        %v1894 = vand.u32 %v461, 4294901760
        %1895 = vmatmul.mubr.f32.gmra.mrb[0].mxu0 %v1894
        %v1896 = vpop.f32.mrb[0].mxu0
        %v1897 = vadd.f32 %v1581, %v1896
        %v1898 = vpop.f32.mrb[0].mxu0
        %1899 = vmatprep.mubr.f32.mxu0 0.0
        %v1900 = vand.u32 %v464, 4294901760
        %1901 = vmatmul.mubr.f32.gmra.mrb[0].mxu0 %v1900
        %v1902 = vpop.f32.mrb[0].mxu0
        %v1903 = vadd.f32 %v1589, %v1902
        %v1904 = vpop.f32.mrb[0].mxu0
        %1905 = vmatprep.mubr.f32.mxu0 0.0
        %v1906 = vand.u32 %v467, 4294901760
        %1907 = vmatmul.mubr.f32.gmra.mrb[0].mxu0 %v1906
        %v1908 = vpop.f32.mrb[0].mxu0
        %v1909 = vadd.f32 %v1597, %v1908
        %v1910 = vpop.f32.mrb[0].mxu0
        %1911 = vmatprep.mubr.f32.mxu0 0.0
        %v1912 = vand.u32 %v470, 4294901760
        %1913 = vmatmul.mubr.f32.gmra.mrb[0].mxu0 %v1912
        %v1914 = vpop.f32.mrb[0].mxu0
        %v1915 = vadd.f32 %v1605, %v1914
        %v1916 = vpop.f32.mrb[0].mxu0
        %1917 = vmatprep.mubr.f32.mxu0 0.0
        %v1918 = vand.u32 %v473, 4294901760
        %1919 = vmatmul.mubr.f32.gmra.mrb[0].mxu0 %v1918
        %v1920 = vpop.f32.mrb[0].mxu0
        %v1921 = vadd.f32 %v1613, %v1920
        %v1922 = vpop.f32.mrb[0].mxu0
        %1923 = vmatprep.mubr.f32.mxu0 0.0
        %v1924 = vand.u32 %v476, 4294901760
        %1925 = vmatmul.mubr.f32.gmra.mrb[0].mxu0 %v1924
        %v1926 = vpop.f32.mrb[0].mxu0
        %v1927 = vadd.f32 %v1621, %v1926
        %v1928 = vpop.f32.mrb[0].mxu0
        %1929 = vmatprep.mubr.f32.mxu0 0.0
        %v1930 = vand.u32 %v479, 4294901760
        %1931 = vmatmul.mubr.f32.gmra.mrb[0].mxu0 %v1930
        %v1932 = vpop.f32.mrb[0].mxu0
        %v1933 = vadd.f32 %v1629, %v1932
        %v1934 = vpop.f32.mrb[0].mxu0
        %1935 = vmatprep.mubr.f32.mxu0 0.0
        %v1936 = vand.u32 %v482, 4294901760
        %1937 = vmatmul.mubr.f32.gmra.mrb[0].mxu0 %v1936
        %v1938 = vpop.f32.mrb[0].mxu0
        %v1939 = vadd.f32 %v1637, %v1938
        %v1940 = vpop.f32.mrb[0].mxu0
        %1941 = vmatprep.mubr.f32.mxu0 0.0
        %v1942 = vand.u32 %v485, 4294901760
        %1943 = vmatmul.mubr.f32.gmra.mrb[0].mxu0 %v1942
        %v1944 = vpop.f32.mrb[0].mxu0
        %v1945 = vadd.f32 %v1645, %v1944
        %v1946 = vpop.f32.mrb[0].mxu0
        %1947 = vmatprep.mubr.f32.mxu0 0.0
        %v1948 = vand.u32 %v488, 4294901760
        %1949 = vmatmul.mubr.f32.gmra.mrb[0].mxu0 %v1948
        %v1950 = vpop.f32.mrb[0].mxu0
        %v1951 = vadd.f32 %v1653, %v1950
        %v1952 = vpop.f32.mrb[0].mxu0
        %1953 = vmatprep.mubr.f32.mxu0 0.0
        %v1954 = vand.u32 %v491, 4294901760
        %1955 = vmatmul.mubr.f32.gmra.mrb[0].mxu0 %v1954
        %v1956 = vpop.f32.mrb[0].mxu0
        %v1957 = vadd.f32 %v1661, %v1956
        %v1958 = vpop.f32.mrb[0].mxu0
        %1959 = vmatprep.mubr.f32.mxu0 0.0
        %v1960 = vand.u32 %v494, 4294901760
        %1961 = vmatmul.mubr.f32.gmra.mrb[0].mxu0 %v1960
        %v1962 = vpop.f32.mrb[0].mxu0
        %v1963 = vadd.f32 %v1669, %v1962
        %v1964 = vpop.f32.mrb[0].mxu0
        %1965 = vmatprep.mubr.f32.mxu0 0.0
        %v1966 = vand.u32 %v497, 4294901760
        %1967 = vmatmul.mubr.f32.gmra.mrb[0].mxu0 %v1966
        %v1968 = vpop.f32.mrb[0].mxu0
        %v1969 = vadd.f32 %v1677, %v1968
        %v1970 = vpop.f32.mrb[0].mxu0
        %1971 = vmatprep.mubr.f32.mxu0 0.0
        %v1972 = vand.u32 %v500, 4294901760
        %1973 = vmatmul.mubr.f32.gmra.mrb[0].mxu0 %v1972
        %v1974 = vpop.f32.mrb[0].mxu0
        %v1975 = vadd.f32 %v1685, %v1974
        %v1976 = vpop.f32.mrb[0].mxu0
        %1977 = vmatprep.mubr.f32.mxu0 0.0
        %v1978 = vand.u32 %v503, 4294901760
        %1979 = vmatmul.mubr.f32.gmra.mrb[0].mxu0 %v1978
        %v1980 = vpop.f32.mrb[0].mxu0
        %v1981 = vadd.f32 %v1693, %v1980
        %v1982 = vpop.f32.mrb[0].mxu0
        %1983 = vmatprep.mubr.f32.mxu0 0.0
        %v1984 = vand.u32 %v506, 4294901760
        %1985 = vmatmul.mubr.f32.gmra.mrb[0].mxu0 %v1984
        %v1986 = vpop.f32.mrb[0].mxu0
        %v1987 = vadd.f32 %v1701, %v1986
        %v1988 = vpop.f32.mrb[0].mxu0
        %1989 = vmatprep.mubr.f32.mxu0 0.0
        %v1990 = vand.u32 %v509, 4294901760
        %1991 = vmatmul.mubr.f32.gmra.mrb[0].mxu0 %v1990
        %v1992 = vpop.f32.mrb[0].mxu0
        %v1993 = vadd.f32 %v1709, %v1992
        %v1994 = vpop.f32.mrb[0].mxu0
        %1995 = vmatprep.mubr.f32.mxu0 0.0
        %v1996 = vand.u32 %v512, 4294901760
        %1997 = vmatmul.mubr.f32.gmra.mrb[0].mxu0 %v1996
        %v1998 = vpop.f32.mrb[0].mxu0
        %v1999 = vadd.f32 %v1717, %v1998
        %v2000 = vpop.f32.mrb[0].mxu0
        %2001 = vmatprep.mubr.f32.mxu0 0.0
        %v2002 = vand.u32 %v515, 4294901760
        %2003 = vmatmul.mubr.f32.gmra.mrb[0].mxu0 %v2002
        %v2004 = vpop.f32.mrb[0].mxu0
        %v2005 = vadd.f32 %v1725, %v2004
        %v2006 = vpop.f32.mrb[0].mxu0
        %2007 = vmatprep.mubr.f32.mxu0 0.0
        %v2008 = vand.u32 %v518, 4294901760
        %2009 = vmatmul.mubr.f32.gmra.mrb[0].mxu0 %v2008
        %v2010 = vpop.f32.mrb[0].mxu0
        %v2011 = vadd.f32 %v1733, %v2010
        %v2012 = vpop.f32.mrb[0].mxu0
        %2013 = vmatprep.mubr.f32.mxu0 0.0
        %v2014 = vand.u32 %v521, 4294901760
        %2015 = vmatmul.mubr.f32.gmra.mrb[0].mxu0 %v2014
        %v2016 = vpop.f32.mrb[0].mxu0
        %v2017 = vadd.f32 %v1741, %v2016
        %v2018 = vpop.f32.mrb[0].mxu0
        %2019 = vmatprep.mubr.f32.mxu0 0.0
        %v2020 = vand.u32 %v524, 4294901760
        %2021 = vmatmul.mubr.f32.gmra.mrb[0].mxu0 %v2020
        %v2022 = vpop.f32.mrb[0].mxu0
        %v2023 = vadd.f32 %v1749, %v2022
        %v2024 = vpop.f32.mrb[0].mxu0
        %2025 = vmatprep.mubr.f32.mxu0 0.0
        %v2026 = vand.u32 %v527, 4294901760
        %2027 = vmatmul.mubr.f32.gmra.mrb[0].mxu0 %v2026
        %v2028 = vpop.f32.mrb[0].mxu0
        %v2029 = vadd.f32 %v1757, %v2028
        %v2030 = vpop.f32.mrb[0].mxu0
        %2031 = vmatprep.mubr.f32.mxu0 0.0
        %v2032 = vand.u32 %v530, 4294901760
        %2033 = vmatmul.mubr.f32.gmra.mrb[0].mxu0 %v2032
        %v2034 = vpop.f32.mrb[0].mxu0
        %v2035 = vadd.f32 %v1765, %v2034
        %v2036 = vpop.f32.mrb[0].mxu0
        %2037 = vmatprep.mubr.f32.mxu0 0.0
        %v2038 = vand.u32 %v533, 4294901760
        %2039 = vmatmul.mubr.f32.gmra.mrb[0].mxu0 %v2038
        %v2040 = vpop.f32.mrb[0].mxu0
        %v2041 = vadd.f32 %v1773, %v2040
        %v2042 = vpop.f32.mrb[0].mxu0
        %2043 = vmatprep.mubr.f32.mxu0 0.0
        %v2044 = vand.u32 %v536, 4294901760
        %2045 = vmatmul.mubr.f32.gmra.mrb[0].mxu0 %v2044
        %v2046 = vpop.f32.mrb[0].mxu0
        %v2047 = vadd.f32 %v1781, %v2046
        %v2048 = vpop.f32.mrb[0].mxu0
        %2049 = vmatprep.mubr.f32.mxu0 0.0
        %v2050 = vand.u32 %v539, 4294901760
        %2051 = vmatmul.mubr.f32.gmra.mrb[0].mxu0 %v2050
        %v2052 = vpop.f32.mrb[0].mxu0
        %v2053 = vadd.f32 %v1789, %v2052
        %v2054 = vpop.f32.mrb[0].mxu0
        %2055 = vmatprep.mubr.f32.mxu0 0.0
        %v2056 = vand.u32 %v542, 4294901760
        %2057 = vmatmul.mubr.f32.gmra.mrb[0].mxu0 %v2056
        %v2058 = vpop.f32.mrb[0].mxu0
        %v2059 = vadd.f32 %v1797, %v2058
        %v2060 = vpop.f32.mrb[0].mxu0
        %2061 = vmatprep.mubr.f32.mxu0 0.0
        %v2062 = vand.u32 %v545, 4294901760
        %2063 = vmatmul.mubr.f32.gmra.mrb[0].mxu0 %v2062
        %v2064 = vpop.f32.mrb[0].mxu0
        %v2065 = vadd.f32 %v1805, %v2064
        %v2066 = vpop.f32.mrb[0].mxu0
        %2067 = vdwg.mxu0
        %2068 = vmatprep.subr.mxu0 0.0
        %v2069 = vand.u32 %v385, 4294901760
        %2070 = vmatpush1.msra.mxu0 %v2069
        %2071 = vmatprep.subr.mxu0 0.0
        %2072 = vmatpush1.msra.mxu0 0.0
        %2073 = vmatprep.subr.mxu0 0.0
        %2074 = vmatpush1.msra.mxu0 0.0
        %2075 = vmatprep.subr.mxu0 0.0
        %2076 = vmatpush1.msra.mxu0 0.0
        %2077 = vmatprep.subr.mxu0 0.0
        %2078 = vmatpush1.msra.mxu0 0.0
        %2079 = vmatprep.subr.mxu0 0.0
        %2080 = vmatpush1.msra.mxu0 0.0
        %2081 = vmatprep.subr.mxu0 0.0
        %2082 = vmatpush1.msra.mxu0 0.0
        %2083 = vmatprep.subr.mxu0 0.0
        %2084 = vmatpush1.msra.mxu0 0.0
        %2085 = vmatprep.subr.mxu0 0.0
        %2086 = vmatpush1.msra.mxu0 0.0
        %2087 = vmatprep.subr.mxu0 0.0
        %2088 = vmatpush1.msra.mxu0 0.0
        %2089 = vmatprep.subr.mxu0 0.0
        %2090 = vmatpush1.msra.mxu0 0.0
        %2091 = vmatprep.subr.mxu0 0.0
        %2092 = vmatpush1.msra.mxu0 0.0
        %2093 = vmatprep.subr.mxu0 0.0
        %2094 = vmatpush1.msra.mxu0 0.0
        %2095 = vmatprep.subr.mxu0 0.0
        %2096 = vmatpush1.msra.mxu0 0.0
        %2097 = vmatprep.subr.mxu0 0.0
        %2098 = vmatpush1.msra.mxu0 0.0
        %2099 = vmatprep.subr.mxu0 0.0
        %2100 = vmatpush1.msra.mxu0 0.0
        %2101 = vmatprep.subr.mxu0 0.0
        %2102 = vmatpush1.msra.mxu0 0.0
        %2103 = vmatprep.subr.mxu0 0.0
        %2104 = vmatpush1.msra.mxu0 0.0
        %2105 = vmatprep.subr.mxu0 0.0
        %2106 = vmatpush1.msra.mxu0 0.0
        %2107 = vmatprep.subr.mxu0 0.0
        %2108 = vmatpush1.msra.mxu0 0.0
        %2109 = vmatprep.subr.mxu0 0.0
        %2110 = vmatpush1.msra.mxu0 0.0
        %2111 = vmatprep.subr.mxu0 0.0
        %2112 = vmatpush1.msra.mxu0 0.0
        %2113 = vmatprep.subr.mxu0 0.0
        %2114 = vmatpush1.msra.mxu0 0.0
        %2115 = vmatprep.subr.mxu0 0.0
        %2116 = vmatpush1.msra.mxu0 0.0
        %2117 = vmatprep.subr.mxu0 0.0
        %2118 = vmatpush1.msra.mxu0 0.0
        %2119 = vmatprep.subr.mxu0 0.0
        %2120 = vmatpush1.msra.mxu0 0.0
        %2121 = vmatprep.subr.mxu0 0.0
        %2122 = vmatpush1.msra.mxu0 0.0
        %2123 = vmatprep.subr.mxu0 0.0
        %2124 = vmatpush1.msra.mxu0 0.0
        %2125 = vmatprep.subr.mxu0 0.0
        %2126 = vmatpush1.msra.mxu0 0.0
        %2127 = vmatprep.subr.mxu0 0.0
        %2128 = vmatpush1.msra.mxu0 0.0
        %2129 = vmatprep.subr.mxu0 0.0
        %2130 = vmatpush1.msra.mxu0 0.0
        %2131 = vmatprep.subr.mxu0 0.0
        %2132 = vmatpush1.msra.mxu0 0.0
        %2133 = vmatprep.mubr.f32.mxu0 0.0
        %v2134 = vand.u32 %v452, 4294901760
        %2135 = vmatmul.mubr.f32.gmra.mrb[0].mxu0 %v2134
        %v2136 = vpop.f32.mrb[0].mxu0
        %v2137 = vadd.f32 %v1879, %v2136
        %v2138 = vpop.f32.mrb[0].mxu0
        %2139 = vmatprep.mubr.f32.mxu0 0.0
        %v2140 = vand.u32 %v455, 4294901760
        %2141 = vmatmul.mubr.f32.gmra.mrb[0].mxu0 %v2140
        %v2142 = vpop.f32.mrb[0].mxu0
        %v2143 = vadd.f32 %v1885, %v2142
        %v2144 = vpop.f32.mrb[0].mxu0
        %2145 = vmatprep.mubr.f32.mxu0 0.0
        %v2146 = vand.u32 %v458, 4294901760
        %2147 = vmatmul.mubr.f32.gmra.mrb[0].mxu0 %v2146
        %v2148 = vpop.f32.mrb[0].mxu0
        %v2149 = vadd.f32 %v1891, %v2148
        %v2150 = vpop.f32.mrb[0].mxu0
        %2151 = vmatprep.mubr.f32.mxu0 0.0
        %v2152 = vand.u32 %v461, 4294901760
        %2153 = vmatmul.mubr.f32.gmra.mrb[0].mxu0 %v2152
        %v2154 = vpop.f32.mrb[0].mxu0
        %v2155 = vadd.f32 %v1897, %v2154
        %v2156 = vpop.f32.mrb[0].mxu0
        %2157 = vmatprep.mubr.f32.mxu0 0.0
        %v2158 = vand.u32 %v464, 4294901760
        %2159 = vmatmul.mubr.f32.gmra.mrb[0].mxu0 %v2158
        %v2160 = vpop.f32.mrb[0].mxu0
        %v2161 = vadd.f32 %v1903, %v2160
        %v2162 = vpop.f32.mrb[0].mxu0
        %2163 = vmatprep.mubr.f32.mxu0 0.0
        %v2164 = vand.u32 %v467, 4294901760
        %2165 = vmatmul.mubr.f32.gmra.mrb[0].mxu0 %v2164
        %v2166 = vpop.f32.mrb[0].mxu0
        %v2167 = vadd.f32 %v1909, %v2166
        %v2168 = vpop.f32.mrb[0].mxu0
        %2169 = vmatprep.mubr.f32.mxu0 0.0
        %v2170 = vand.u32 %v470, 4294901760
        %2171 = vmatmul.mubr.f32.gmra.mrb[0].mxu0 %v2170
        %v2172 = vpop.f32.mrb[0].mxu0
        %v2173 = vadd.f32 %v1915, %v2172
        %v2174 = vpop.f32.mrb[0].mxu0
        %2175 = vmatprep.mubr.f32.mxu0 0.0
        %v2176 = vand.u32 %v473, 4294901760
        %2177 = vmatmul.mubr.f32.gmra.mrb[0].mxu0 %v2176
        %v2178 = vpop.f32.mrb[0].mxu0
        %v2179 = vadd.f32 %v1921, %v2178
        %v2180 = vpop.f32.mrb[0].mxu0
        %2181 = vmatprep.mubr.f32.mxu0 0.0
        %v2182 = vand.u32 %v476, 4294901760
        %2183 = vmatmul.mubr.f32.gmra.mrb[0].mxu0 %v2182
        %v2184 = vpop.f32.mrb[0].mxu0
        %v2185 = vadd.f32 %v1927, %v2184
        %v2186 = vpop.f32.mrb[0].mxu0
        %2187 = vmatprep.mubr.f32.mxu0 0.0
        %v2188 = vand.u32 %v479, 4294901760
        %2189 = vmatmul.mubr.f32.gmra.mrb[0].mxu0 %v2188
        %v2190 = vpop.f32.mrb[0].mxu0
        %v2191 = vadd.f32 %v1933, %v2190
        %v2192 = vpop.f32.mrb[0].mxu0
        %2193 = vmatprep.mubr.f32.mxu0 0.0
        %v2194 = vand.u32 %v482, 4294901760
        %2195 = vmatmul.mubr.f32.gmra.mrb[0].mxu0 %v2194
        %v2196 = vpop.f32.mrb[0].mxu0
        %v2197 = vadd.f32 %v1939, %v2196
        %v2198 = vpop.f32.mrb[0].mxu0
        %2199 = vmatprep.mubr.f32.mxu0 0.0
        %v2200 = vand.u32 %v485, 4294901760
        %2201 = vmatmul.mubr.f32.gmra.mrb[0].mxu0 %v2200
        %v2202 = vpop.f32.mrb[0].mxu0
        %v2203 = vadd.f32 %v1945, %v2202
        %v2204 = vpop.f32.mrb[0].mxu0
        %2205 = vmatprep.mubr.f32.mxu0 0.0
        %v2206 = vand.u32 %v488, 4294901760
        %2207 = vmatmul.mubr.f32.gmra.mrb[0].mxu0 %v2206
        %v2208 = vpop.f32.mrb[0].mxu0
        %v2209 = vadd.f32 %v1951, %v2208
        %v2210 = vpop.f32.mrb[0].mxu0
        %2211 = vmatprep.mubr.f32.mxu0 0.0
        %v2212 = vand.u32 %v491, 4294901760
        %2213 = vmatmul.mubr.f32.gmra.mrb[0].mxu0 %v2212
        %v2214 = vpop.f32.mrb[0].mxu0
        %v2215 = vadd.f32 %v1957, %v2214
        %v2216 = vpop.f32.mrb[0].mxu0
        %2217 = vmatprep.mubr.f32.mxu0 0.0
        %v2218 = vand.u32 %v494, 4294901760
        %2219 = vmatmul.mubr.f32.gmra.mrb[0].mxu0 %v2218
        %v2220 = vpop.f32.mrb[0].mxu0
        %v2221 = vadd.f32 %v1963, %v2220
        %v2222 = vpop.f32.mrb[0].mxu0
        %2223 = vmatprep.mubr.f32.mxu0 0.0
        %v2224 = vand.u32 %v497, 4294901760
        %2225 = vmatmul.mubr.f32.gmra.mrb[0].mxu0 %v2224
        %v2226 = vpop.f32.mrb[0].mxu0
        %v2227 = vadd.f32 %v1969, %v2226
        %v2228 = vpop.f32.mrb[0].mxu0
        %2229 = vmatprep.mubr.f32.mxu0 0.0
        %v2230 = vand.u32 %v500, 4294901760
        %2231 = vmatmul.mubr.f32.gmra.mrb[0].mxu0 %v2230
        %v2232 = vpop.f32.mrb[0].mxu0
        %v2233 = vadd.f32 %v1975, %v2232
        %v2234 = vpop.f32.mrb[0].mxu0
        %2235 = vmatprep.mubr.f32.mxu0 0.0
        %v2236 = vand.u32 %v503, 4294901760
        %2237 = vmatmul.mubr.f32.gmra.mrb[0].mxu0 %v2236
        %v2238 = vpop.f32.mrb[0].mxu0
        %v2239 = vadd.f32 %v1981, %v2238
        %v2240 = vpop.f32.mrb[0].mxu0
        %2241 = vmatprep.mubr.f32.mxu0 0.0
        %v2242 = vand.u32 %v506, 4294901760
        %2243 = vmatmul.mubr.f32.gmra.mrb[0].mxu0 %v2242
        %v2244 = vpop.f32.mrb[0].mxu0
        %v2245 = vadd.f32 %v1987, %v2244
        %v2246 = vpop.f32.mrb[0].mxu0
        %2247 = vmatprep.mubr.f32.mxu0 0.0
        %v2248 = vand.u32 %v509, 4294901760
        %2249 = vmatmul.mubr.f32.gmra.mrb[0].mxu0 %v2248
        %v2250 = vpop.f32.mrb[0].mxu0
        %v2251 = vadd.f32 %v1993, %v2250
        %v2252 = vpop.f32.mrb[0].mxu0
        %2253 = vmatprep.mubr.f32.mxu0 0.0
        %v2254 = vand.u32 %v512, 4294901760
        %2255 = vmatmul.mubr.f32.gmra.mrb[0].mxu0 %v2254
        %v2256 = vpop.f32.mrb[0].mxu0
        %v2257 = vadd.f32 %v1999, %v2256
        %v2258 = vpop.f32.mrb[0].mxu0
        %2259 = vmatprep.mubr.f32.mxu0 0.0
        %v2260 = vand.u32 %v515, 4294901760
        %2261 = vmatmul.mubr.f32.gmra.mrb[0].mxu0 %v2260
        %v2262 = vpop.f32.mrb[0].mxu0
        %v2263 = vadd.f32 %v2005, %v2262
        %v2264 = vpop.f32.mrb[0].mxu0
        %2265 = vmatprep.mubr.f32.mxu0 0.0
        %v2266 = vand.u32 %v518, 4294901760
        %2267 = vmatmul.mubr.f32.gmra.mrb[0].mxu0 %v2266
        %v2268 = vpop.f32.mrb[0].mxu0
        %v2269 = vadd.f32 %v2011, %v2268
        %v2270 = vpop.f32.mrb[0].mxu0
        %2271 = vmatprep.mubr.f32.mxu0 0.0
        %v2272 = vand.u32 %v521, 4294901760
        %2273 = vmatmul.mubr.f32.gmra.mrb[0].mxu0 %v2272
        %v2274 = vpop.f32.mrb[0].mxu0
        %v2275 = vadd.f32 %v2017, %v2274
        %v2276 = vpop.f32.mrb[0].mxu0
        %2277 = vmatprep.mubr.f32.mxu0 0.0
        %v2278 = vand.u32 %v524, 4294901760
        %2279 = vmatmul.mubr.f32.gmra.mrb[0].mxu0 %v2278
        %v2280 = vpop.f32.mrb[0].mxu0
        %v2281 = vadd.f32 %v2023, %v2280
        %v2282 = vpop.f32.mrb[0].mxu0
        %2283 = vmatprep.mubr.f32.mxu0 0.0
        %v2284 = vand.u32 %v527, 4294901760
        %2285 = vmatmul.mubr.f32.gmra.mrb[0].mxu0 %v2284
        %v2286 = vpop.f32.mrb[0].mxu0
        %v2287 = vadd.f32 %v2029, %v2286
        %v2288 = vpop.f32.mrb[0].mxu0
        %2289 = vmatprep.mubr.f32.mxu0 0.0
        %v2290 = vand.u32 %v530, 4294901760
        %2291 = vmatmul.mubr.f32.gmra.mrb[0].mxu0 %v2290
        %v2292 = vpop.f32.mrb[0].mxu0
        %v2293 = vadd.f32 %v2035, %v2292
        %v2294 = vpop.f32.mrb[0].mxu0
        %2295 = vmatprep.mubr.f32.mxu0 0.0
        %v2296 = vand.u32 %v533, 4294901760
        %2297 = vmatmul.mubr.f32.gmra.mrb[0].mxu0 %v2296
        %v2298 = vpop.f32.mrb[0].mxu0
        %v2299 = vadd.f32 %v2041, %v2298
        %v2300 = vpop.f32.mrb[0].mxu0
        %2301 = vmatprep.mubr.f32.mxu0 0.0
        %v2302 = vand.u32 %v536, 4294901760
        %2303 = vmatmul.mubr.f32.gmra.mrb[0].mxu0 %v2302
        %v2304 = vpop.f32.mrb[0].mxu0
        %v2305 = vadd.f32 %v2047, %v2304
        %v2306 = vpop.f32.mrb[0].mxu0
        %2307 = vmatprep.mubr.f32.mxu0 0.0
        %v2308 = vand.u32 %v539, 4294901760
        %2309 = vmatmul.mubr.f32.gmra.mrb[0].mxu0 %v2308
        %v2310 = vpop.f32.mrb[0].mxu0
        %v2311 = vadd.f32 %v2053, %v2310
        %v2312 = vpop.f32.mrb[0].mxu0
        %2313 = vmatprep.mubr.f32.mxu0 0.0
        %v2314 = vand.u32 %v542, 4294901760
        %2315 = vmatmul.mubr.f32.gmra.mrb[0].mxu0 %v2314
        %v2316 = vpop.f32.mrb[0].mxu0
        %v2317 = vadd.f32 %v2059, %v2316
        %v2318 = vpop.f32.mrb[0].mxu0
        %2319 = vmatprep.mubr.f32.mxu0 0.0
        %v2320 = vand.u32 %v545, 4294901760
        %2321 = vmatmul.mubr.f32.gmra.mrb[0].mxu0 %v2320
        %v2322 = vpop.f32.mrb[0].mxu0
        %v2323 = vadd.f32 %v2065, %v2322
        %v2324 = vpop.f32.mrb[0].mxu0
        %2325 = vdwg.mxu0
        %2326 = vst.msk [vmem:[%s302] sm:$0xff] %vm450, %v2137
        %2327 = vst.msk [vmem:[%s302 + $0x8] sm:$0xff] %vm450, %v2143
        %2328 = vst.msk [vmem:[%s302 + $0x10] sm:$0xff] %vm450, %v2149
        %2329 = vst.msk [vmem:[%s302 + $0x18] sm:$0xff] %vm450, %v2155
        %2330 = vst.msk [vmem:[%s302 + $0x20] sm:$0xff] %vm450, %v2161
        %2331 = vst.msk [vmem:[%s302 + $0x28] sm:$0xff] %vm450, %v2167
        %2332 = vst.msk [vmem:[%s302 + $0x30] sm:$0xff] %vm450, %v2173
        %2333 = vst.msk [vmem:[%s302 + $0x38] sm:$0xff] %vm450, %v2179
        %2334 = vst.msk [vmem:[%s302 + $0x40] sm:$0xff] %vm450, %v2185
        %2335 = vst.msk [vmem:[%s302 + $0x48] sm:$0xff] %vm450, %v2191
        %2336 = vst.msk [vmem:[%s302 + $0x50] sm:$0xff] %vm450, %v2197
        %2337 = vst.msk [vmem:[%s302 + $0x58] sm:$0xff] %vm450, %v2203
        %2338 = vst.msk [vmem:[%s302 + $0x60] sm:$0xff] %vm450, %v2209
        %2339 = vst.msk [vmem:[%s302 + $0x68] sm:$0xff] %vm450, %v2215
        %2340 = vst.msk [vmem:[%s302 + $0x70] sm:$0xff] %vm450, %v2221
        %2341 = vst.msk [vmem:[%s302 + $0x78] sm:$0xff] %vm450, %v2227
        %2342 = vst.msk [vmem:[%s302 + $0x80] sm:$0xff] %vm450, %v2233
        %2343 = vst.msk [vmem:[%s302 + $0x88] sm:$0xff] %vm450, %v2239
        %2344 = vst.msk [vmem:[%s302 + $0x90] sm:$0xff] %vm450, %v2245
        %2345 = vst.msk [vmem:[%s302 + $0x98] sm:$0xff] %vm450, %v2251
        %2346 = vst.msk [vmem:[%s302 + $0xa0] sm:$0xff] %vm450, %v2257
        %2347 = vst.msk [vmem:[%s302 + $0xa8] sm:$0xff] %vm450, %v2263
        %2348 = vst.msk [vmem:[%s302 + $0xb0] sm:$0xff] %vm450, %v2269
        %2349 = vst.msk [vmem:[%s302 + $0xb8] sm:$0xff] %vm450, %v2275
        %2350 = vst.msk [vmem:[%s302 + $0xc0] sm:$0xff] %vm450, %v2281
        %2351 = vst.msk [vmem:[%s302 + $0xc8] sm:$0xff] %vm450, %v2287
        %2352 = vst.msk [vmem:[%s302 + $0xd0] sm:$0xff] %vm450, %v2293
        %2353 = vst.msk [vmem:[%s302 + $0xd8] sm:$0xff] %vm450, %v2299
        %2354 = vst.msk [vmem:[%s302 + $0xe0] sm:$0xff] %vm450, %v2305
        %2355 = vst.msk [vmem:[%s302 + $0xe8] sm:$0xff] %vm450, %v2311
        %2356 = vst.msk [vmem:[%s302 + $0xf0] sm:$0xff] %vm450, %v2317
        %2357 = vst.msk [vmem:[%s302 + $0xf8] sm:$0xff] %vm450, %v2323
        %s2358 = smul.u32 32, %s25
        %p2359 = scmp.lt.s32.totalorder %s23, 1
        %s2360 = scalar_select %p2359, %s23, 1
        %p2361 = scmp.lt.s32.totalorder %s24, 2
        %s2362 = scalar_select %p2361, %s24, 2
        %p2363 = scmp.lt.s32.totalorder %s2358, 31
        %s2364 = scalar_select %p2363, %s2358, 31
        %s2365 = smul.addr %s2362, 32
        %s2366 = sadd.s32 %s2364, %s2365
        %s2367 = smul.addr %s2360, 96
        %s2368 = sadd.s32 %s2366, %s2367
        %s2369 = smul.addr %s2368, 8
        %s2370 = scalar_lea.vmem %s4, %s2369
        // Predicated region
        $region41: #{tpu_custom_call.1} parent=35 // pred_check
          %p2371 = pneg %p162
        $region42: #{tpu_custom_call.1} parent=35 // pred_check_branch
          %2373 = sbr.rel (%p2371) target = $region44
        $region43: #{tpu_custom_call.1} parent=35 // pred_region
          %s2374 = smul.u32 32, %s25
        $region44: #{tpu_custom_call.1} parent=35 // pred_fallthru
          _
      $region36: #{tpu_custom_call.1} parent=5 // pred_fallthru
        _
      %p2375 = scmp.le.s32.totalorder 2, %s13
      // Predicated region
      $region45: #{tpu_custom_call.1} parent=5 // pred_check
        %p2376 = pneg %p2375
      $region46: #{tpu_custom_call.1} parent=5 // pred_check_branch
        %2378 = sbr.rel (%p2376) target = $region48
      $region47: #{tpu_custom_call.1} parent=5 // pred_region
        %s2379 = ssub.s32 %s13, 2
        // Predicated region
        $region49: #{tpu_custom_call.1} parent=47 // pred_check
          %p2380 = pneg %p168
        $region50: #{tpu_custom_call.1} parent=47 // pred_check_branch
          %2382 = sbr.rel (%p2380) target = $region52
        $region51: #{tpu_custom_call.1} parent=47 // pred_region
          %s2383 = smul.u32 32, %s28
          %p2384 = scmp.lt.s32.totalorder %s26, 1
          %s2385 = scalar_select %p2384, %s26, 1
          %p2386 = scmp.lt.s32.totalorder %s27, 2
          %s2387 = scalar_select %p2386, %s27, 2
          %p2388 = scmp.lt.s32.totalorder %s2383, 31
          %s2389 = scalar_select %p2388, %s2383, 31
          %s2390 = smul.addr %s2387, 32
          %s2391 = sadd.s32 %s2389, %s2390
          %s2392 = smul.addr %s2385, 96
          %s2393 = sadd.s32 %s2391, %s2392
          %s2394 = smul.addr %s2393, 8
          %s2395 = scalar_lea.vmem %s4, %s2394
        $region52: #{tpu_custom_call.1} parent=47 // pred_fallthru
          _
      $region48: #{tpu_custom_call.1} parent=5 // pred_fallthru
        _
    $region6: #{tpu_custom_call.1} parent=1 // loop_footer
      %s17 = sadd.s32 1, %s13
    $region7: #{tpu_custom_call.1} parent=1 // loop_footer_branch
      %12 = sbr.rel target = $region3
    $region8: #{tpu_custom_call.1} parent=1 // loop_exit
      _
    %2396 = vsyncpa [#allocation3], 1
    %s2397 = scalar_lea.sflag [#allocation3], 1
    %2398 = vsyncpa %s2397, 1

</llo_original>
